<compile_context>
chip_gen: v5e
topology: v5e:2x2
jax: 0.10.0
libtpu: 0.0.40
codegen_flags: <defaults>
</compile_context>

<pallas_src>
import jax
import jax.numpy as jnp
from jax.experimental import pallas as pl
from jax.experimental.pallas import tpu as pltpu

KH = KW = 3
STRIDE = 2


@jax.jit
def mixed_5a(x_nchw, conv_w, gamma, beta, running_mean, running_var, eps=1e-3):
    x_nchw = x_nchw.astype(jnp.float32)
    B, C, H, W = x_nchw.shape
    Cout = conv_w.shape[0]
    Ho = (H - KH) // STRIDE + 1
    Wo = (W - KW) // STRIDE + 1
    M = Ho * Wo                    # output pixels per batch element
    K = KH * KW * C                # im2col contraction depth (1728)

    # ---- Wrapper-side fused layout pass: NCHW -> NHWC -> im2col (B, M, 9C) ----
    # Single transpose + concat-of-strided-slices; XLA fuses this into one
    # (or two) layout kernels.  The Pallas kernel then needs zero relayouts.
    x_nhwc = jnp.transpose(x_nchw, (0, 2, 3, 1))                 # (B, H, W, C)
    taps = []
    for kh in range(KH):
        for kw in range(KW):
            taps.append(
                x_nhwc[:, kh:kh + STRIDE * (Ho - 1) + 1:STRIDE,
                       kw:kw + STRIDE * (Wo - 1) + 1:STRIDE, :])  # (B, Ho, Wo, C)
    col = jnp.concatenate(taps, axis=-1).reshape(B, M, K)         # (B, M, 9C)

    # ---- Fold inference BN scale into the conv weights; keep bias + ReLU ----
    inv_std = 1.0 / jnp.sqrt(running_var.astype(jnp.float32) + eps)
    scale = gamma.astype(jnp.float32) * inv_std                   # (Cout,)
    w = jnp.transpose(conv_w.astype(jnp.float32), (2, 3, 1, 0))   # (KH,KW,Cin,Cout)
    w = (w * scale[None, None, None, :]).reshape(K, Cout)         # (9C, Cout)
    bias = (beta.astype(jnp.float32)
            - running_mean.astype(jnp.float32) * scale).reshape(1, Cout)

    def kernel(col_ref, w_ref, b_ref, out_ref):
        col_b = col_ref[0]                                        # (M, 9C), no relayout
        # Single K=1728 MXU matmul (folded-BN weights), then bias + ReLU.
        conv = jnp.dot(col_b, w_ref[...], preferred_element_type=jnp.float32)
        conv = jnp.maximum(conv + b_ref[...], 0.0)                # (M, Cout)
        # Maxpool over the 9 taps, sharing the im2col load (VPU max only).
        pmax = col_b[:, 0:C]
        for k in range(1, KH * KW):
            pmax = jnp.maximum(pmax, col_b[:, k * C:(k + 1) * C])  # (M, C)
        # In-kernel channel concat; single lane-dense (M, Cout+C) store.
        out_ref[0] = jnp.concatenate([conv, pmax], axis=-1)

    out = pl.pallas_call(
        kernel,
        grid=(B,),
        in_specs=[
            pl.BlockSpec((1, M, K), lambda b: (b, 0, 0)),          # im2col slab
            pl.BlockSpec((K, Cout), lambda b: (0, 0)),             # resident weights
            pl.BlockSpec((1, Cout), lambda b: (0, 0)),             # resident bias
        ],
        out_specs=pl.BlockSpec((1, M, Cout + C), lambda b: (b, 0, 0)),
        out_shape=jax.ShapeDtypeStruct((B, M, Cout + C), jnp.float32),
        compiler_params=pltpu.CompilerParams(
            dimension_semantics=("parallel",)),
    )(col, w, bias)

    # Wrapper-side NHWC->NCHW: one XLA transpose + free reshape.
    return jnp.transpose(out, (0, 2, 1)).reshape(B, Cout + C, Ho, Wo)


def _reference(x, conv_w, gamma, beta, mean, var, eps=1e-3):
    """Pure-JAX reference of the PyTorch forward (inference-mode BN)."""
    conv = jax.lax.conv_general_dilated(
        x, conv_w, window_strides=(STRIDE, STRIDE), padding="VALID",
        dimension_numbers=("NCHW", "OIHW", "NCHW"))
    s = (gamma / jnp.sqrt(var + eps))[None, :, None, None]
    sh = (beta - mean * gamma / jnp.sqrt(var + eps))[None, :, None, None]
    relu = jnp.maximum(conv * s + sh, 0.0)
    pool = jax.lax.reduce_window(x, -jnp.inf, jax.lax.max,
                                 (1, 1, KH, KW), (1, 1, STRIDE, STRIDE),
                                 "VALID")
    return jnp.concatenate([relu, pool], axis=1)


if __name__ == "__main__":
    key = jax.random.PRNGKey(0)
    k1, k2, k3, k4, k5, k6 = jax.random.split(key, 6)

    # channels fixed at 192 by the module; small batch / spatial extent.
    B, C, H, W = 2, 192, 9, 9
    x = jax.random.normal(k1, (B, C, H, W), jnp.float32)

    # deterministic synthetic parameters (shapes from Mixed_5a.__init__)
    conv_w = 0.05 * jax.random.normal(k2, (192, 192, KH, KW), jnp.float32)
    gamma = 1.0 + 0.1 * jax.random.normal(k3, (192,), jnp.float32)
    beta = 0.1 * jax.random.normal(k4, (192,), jnp.float32)
    running_mean = 0.1 * jax.random.normal(k5, (192,), jnp.float32)
    running_var = jnp.abs(jax.random.normal(k6, (192,), jnp.float32)) + 0.5

    out = mixed_5a(x, conv_w, gamma, beta, running_mean, running_var)
    out = jax.block_until_ready(out)

    ref = _reference(x, conv_w, gamma, beta, running_mean, running_var)
    assert out.shape == ref.shape == (B, 2 * 192, 4, 4), out.shape
    max_err = float(jnp.max(jnp.abs(out - ref)))
    assert jnp.allclose(out, ref, atol=1e-3, rtol=1e-3), max_err

    print("KERNEL_OK")
</pallas_src>

<mosaic_0001>
module attributes {stable_mosaic.version = 11 : i64} {
  func.func @kernel(%arg0: i32, %arg1: memref<1x16x1728xf32, #tpu.memory_space<vmem>>, %arg2: memref<1728x192xf32, #tpu.memory_space<vmem>>, %arg3: memref<1x192xf32, #tpu.memory_space<vmem>>, %arg4: memref<1x16x384xf32, #tpu.memory_space<vmem>>) attributes {dimension_semantics = [#tpu.dimension_semantics<parallel>], iteration_bounds = array<i64: 2>, scalar_prefetch = 0 : i64, scratch_operands = 0 : i64, tpu.core_type = #tpu.core_type<tc>, window_params = [{transform_indices = @transform_0, window_bounds = array<i64: 1, 16, 1728>}, {pipeline_mode = #tpu.pipeline_mode<synchronous>, transform_indices = @transform_1, window_bounds = array<i64: 1728, 192>}, {pipeline_mode = #tpu.pipeline_mode<synchronous>, transform_indices = @transform_2, window_bounds = array<i64: 1, 192>}, {transform_indices = @transform_3, window_bounds = array<i64: 1, 16, 384>}]} {
    %c0 = arith.constant 0 : index
    %c0_0 = arith.constant 0 : index
    %c0_1 = arith.constant 0 : index
    %0 = vector.load %arg1[%c0, %c0_0, %c0_1] : memref<1x16x1728xf32, #tpu.memory_space<vmem>>, vector<1x16x1728xf32>
    %1 = vector.shape_cast %0 : vector<1x16x1728xf32> to vector<16x1728xf32>
    %c0_2 = arith.constant 0 : index
    %c0_3 = arith.constant 0 : index
    %2 = vector.load %arg2[%c0_2, %c0_3] : memref<1728x192xf32, #tpu.memory_space<vmem>>, vector<1728x192xf32>
    %cst = arith.constant dense<0.000000e+00> : vector<16x192xf32>
    %3 = tpu.matmul %1, %2, %cst {dimension_numbers = #tpu.dot_dimension_numbers<[1], [0], [0], [1], [0, 0, 1, 1], [], []>} : vector<16x1728xf32>, vector<1728x192xf32>, vector<16x192xf32> -> vector<16x192xf32>
    %c0_4 = arith.constant 0 : index
    %c0_5 = arith.constant 0 : index
    %4 = vector.load %arg3[%c0_4, %c0_5] : memref<1x192xf32, #tpu.memory_space<vmem>>, vector<1x192xf32>
    %5 = vector.broadcast %4 : vector<1x192xf32> to vector<16x192xf32>
    %6 = arith.addf %3, %5 : vector<16x192xf32>
    %cst_6 = arith.constant 0.000000e+00 : f32
    %7 = vector.broadcast %cst_6 : f32 to vector<16x192xf32>
    %8 = arith.maximumf %6, %7 : vector<16x192xf32>
    %9 = vector.extract_strided_slice %1 {offsets = [0, 0], sizes = [16, 192], strides = [1, 1]} : vector<16x1728xf32> to vector<16x192xf32>
    %10 = vector.extract_strided_slice %1 {offsets = [0, 192], sizes = [16, 192], strides = [1, 1]} : vector<16x1728xf32> to vector<16x192xf32>
    %11 = arith.maximumf %9, %10 : vector<16x192xf32>
    %12 = vector.extract_strided_slice %1 {offsets = [0, 384], sizes = [16, 192], strides = [1, 1]} : vector<16x1728xf32> to vector<16x192xf32>
    %13 = arith.maximumf %11, %12 : vector<16x192xf32>
    %14 = vector.extract_strided_slice %1 {offsets = [0, 576], sizes = [16, 192], strides = [1, 1]} : vector<16x1728xf32> to vector<16x192xf32>
    %15 = arith.maximumf %13, %14 : vector<16x192xf32>
    %16 = vector.extract_strided_slice %1 {offsets = [0, 768], sizes = [16, 192], strides = [1, 1]} : vector<16x1728xf32> to vector<16x192xf32>
    %17 = arith.maximumf %15, %16 : vector<16x192xf32>
    %18 = vector.extract_strided_slice %1 {offsets = [0, 960], sizes = [16, 192], strides = [1, 1]} : vector<16x1728xf32> to vector<16x192xf32>
    %19 = arith.maximumf %17, %18 : vector<16x192xf32>
    %20 = vector.extract_strided_slice %1 {offsets = [0, 1152], sizes = [16, 192], strides = [1, 1]} : vector<16x1728xf32> to vector<16x192xf32>
    %21 = arith.maximumf %19, %20 : vector<16x192xf32>
    %22 = vector.extract_strided_slice %1 {offsets = [0, 1344], sizes = [16, 192], strides = [1, 1]} : vector<16x1728xf32> to vector<16x192xf32>
    %23 = arith.maximumf %21, %22 : vector<16x192xf32>
    %24 = vector.extract_strided_slice %1 {offsets = [0, 1536], sizes = [16, 192], strides = [1, 1]} : vector<16x1728xf32> to vector<16x192xf32>
    %25 = arith.maximumf %23, %24 : vector<16x192xf32>
    %26 = tpu.concatenate %8, %25 in 1 : vector<16x192xf32>, vector<16x192xf32> -> vector<16x384xf32>
    %c0_7 = arith.constant 0 : index
    %c0_8 = arith.constant 0 : index
    %c0_9 = arith.constant 0 : index
    %27 = vector.load %arg4[%c0_7, %c0_8, %c0_9] : memref<1x16x384xf32, #tpu.memory_space<vmem>>, vector<1x16x384xf32>
    %28 = vector.shape_cast %27 : vector<1x16x384xf32> to vector<16x384xf32>
    %29 = vector.shape_cast %26 : vector<16x384xf32> to vector<1x16x384xf32>
    tpu.vector_store %arg4[%c0_7, %c0_8, %c0_9], %29 {strides = array<i32>} : memref<1x16x384xf32, #tpu.memory_space<vmem>>, vector<1x16x384xf32>,
    return
  }
  func.func @transform_0(%arg0: i32) -> (i32, i32, i32) {
    %c0_i32 = arith.constant 0 : i32
    %c0_i32_0 = arith.constant 0 : i32
    %c0_i32_1 = arith.constant 0 : i32
    return %arg0, %c0_i32, %c0_i32_0 : i32, i32, i32
  }
  func.func @transform_1(%arg0: i32) -> (i32, i32) {
    %c0_i32 = arith.constant 0 : i32
    %c0_i32_0 = arith.constant 0 : i32
    %c0_i32_1 = arith.constant 0 : i32
    return %c0_i32, %c0_i32_0 : i32, i32
  }
  func.func @transform_2(%arg0: i32) -> (i32, i32) {
    %c0_i32 = arith.constant 0 : i32
    %c0_i32_0 = arith.constant 0 : i32
    %c0_i32_1 = arith.constant 0 : i32
    return %c0_i32, %c0_i32_0 : i32, i32
  }
  func.func @transform_3(%arg0: i32) -> (i32, i32, i32) {
    %c0_i32 = arith.constant 0 : i32
    %c0_i32_0 = arith.constant 0 : i32
    %c0_i32_1 = arith.constant 0 : i32
    return %arg0, %c0_i32, %c0_i32_0 : i32, i32, i32
  }
}

</mosaic_0001>

<llo_original>
// kernel: mixed_5a.1
$region0: #{mixed_5a.1}
  #allocation0 [shape = 'u32[]', space=smem, size = 0x4, offset = 0x4, fixed_abs, tag = 'smem constant byte address 0x4 - core index']
  #allocation1 [shape = 'u32[72,128]{1,0:T(1,128)}', space=vmem, size = 0x9000, scoped, tag = 'internal scratch']
  %s0 = inlined_call_operand.vmem [shape: f32[2,16,1728], index: 0, kind: input, shape index: {}]
  %s1 = inlined_call_operand.vmem [shape: f32[1728,192], index: 1, kind: input, shape index: {}]
  %s2 = inlined_call_operand.vmem [shape: f32[1,192], index: 2, kind: input, shape index: {}]
  %s3 = inlined_call_operand.vmem [shape: f32[2,16,384], index: 3, kind: output, shape index: {}]
  %s4 = sld [smem:[#allocation0]]
  $region45: #{mixed_5a.1} parent=0
    _
  %s6 = ssub.s32 1, %s4
  %s7 = scalar_select 0, %s6, %s4
  loop: start=0, step=1, limit=4
  $region2: #{mixed_5a.1} parent=0 // loop_pre_header
    _
  $region3: #{mixed_5a.1} parent=0 // loop_header
    %s9 = sphi 0, %s13
    %p10 = scmp.ge.s32.totalorder %s9, 4
    %s19 = sphi 0, %s21
    %s22 = sphi 0, %s19
    %s23 = sphi 0, %s22
    %s39 = sphi 0, %s23
    %s43 = sphi 0, %s43
    %s45 = sphi 0, %s43
    %s46 = sphi 0, %s45
    %s60 = sphi 0, %s46
    %s64 = sphi 0, %s64
    %s66 = sphi 0, %s64
    %s67 = sphi 0, %s66
    %s81 = sphi 0, %s67
    %s87 = sphi 0, %s89
    %s90 = sphi 0, %s87
    %s91 = sphi 0, %s90
    %s107 = sphi 0, %s91
  $region4: #{mixed_5a.1} parent=0 // loop_header_branch
    %12 = sbr.rel (%p10) target = $region8
  $region5: #{mixed_5a.1} parent=0 // loop_body
    %s14 = ssub.s32 %s9, 1
    %s15 = ssub.s32 %s9, 2
    %s16 = sadd.s32 %s9, 1
    %s17 = ssub.s32 %s9, %s16
    %p18 = scmp.eq.s32.totalorder %s17, 0
    %s20 = sadd.s32 %s19, 1
    %s21 = scalar_select %p18, %s19, %s20
    %p24 = pneg %p18
    %p25 = scmp.eq.s32.totalorder %s9, 1
    %p26 = por %p24, %p25
    %p27 = scmp.ne.s32.totalorder %s19, %s22
    %p28 = scmp.eq.s32.totalorder %s9, 0
    %p29 = por %p27, %p28
    %p30 = scmp.ne.s32.totalorder %s19, %s22
    %p31 = scmp.eq.s32.totalorder %s14, 1
    %p32 = por %p30, %p31
    %p33 = scmp.ne.s32.totalorder %s22, %s23
    %p34 = scmp.eq.s32.totalorder %s14, 0
    %p35 = por %p33, %p34
    %p36 = scmp.ne.s32.totalorder %s22, %s23
    %p37 = scmp.eq.s32.totalorder %s15, 1
    %p38 = por %p36, %p37
    %p40 = scmp.ne.s32.totalorder %s23, %s39
    %p41 = scmp.eq.s32.totalorder %s15, 0
    %p42 = por %p40, %p41
    %s44 = sadd.s32 %s43, 1
    %p47 = scmp.eq.s32.totalorder %s9, 1
    %p48 = scmp.ne.s32.totalorder %s43, %s45
    %p49 = scmp.eq.s32.totalorder %s9, 0
    %p50 = por %p48, %p49
    %p51 = scmp.ne.s32.totalorder %s43, %s45
    %p52 = scmp.eq.s32.totalorder %s14, 1
    %p53 = por %p51, %p52
    %p54 = scmp.ne.s32.totalorder %s45, %s46
    %p55 = scmp.eq.s32.totalorder %s14, 0
    %p56 = por %p54, %p55
    %p57 = scmp.ne.s32.totalorder %s45, %s46
    %p58 = scmp.eq.s32.totalorder %s15, 1
    %p59 = por %p57, %p58
    %p61 = scmp.ne.s32.totalorder %s46, %s60
    %p62 = scmp.eq.s32.totalorder %s15, 0
    %p63 = por %p61, %p62
    %s65 = sadd.s32 %s64, 1
    %p68 = scmp.eq.s32.totalorder %s9, 1
    %p69 = scmp.ne.s32.totalorder %s64, %s66
    %p70 = scmp.eq.s32.totalorder %s9, 0
    %p71 = por %p69, %p70
    %p72 = scmp.ne.s32.totalorder %s64, %s66
    %p73 = scmp.eq.s32.totalorder %s14, 1
    %p74 = por %p72, %p73
    %p75 = scmp.ne.s32.totalorder %s66, %s67
    %p76 = scmp.eq.s32.totalorder %s14, 0
    %p77 = por %p75, %p76
    %p78 = scmp.ne.s32.totalorder %s66, %s67
    %p79 = scmp.eq.s32.totalorder %s15, 1
    %p80 = por %p78, %p79
    %p82 = scmp.ne.s32.totalorder %s67, %s81
    %p83 = scmp.eq.s32.totalorder %s15, 0
    %p84 = por %p82, %p83
    %s85 = ssub.s32 %s9, %s16
    %p86 = scmp.eq.s32.totalorder %s85, 0
    %s88 = sadd.s32 %s87, 1
    %s89 = scalar_select %p86, %s87, %s88
    %p92 = pneg %p86
    %p93 = scmp.eq.s32.totalorder %s9, 1
    %p94 = por %p92, %p93
    %p95 = scmp.ne.s32.totalorder %s87, %s90
    %p96 = scmp.eq.s32.totalorder %s9, 0
    %p97 = por %p95, %p96
    %p98 = scmp.ne.s32.totalorder %s87, %s90
    %p99 = scmp.eq.s32.totalorder %s14, 1
    %p100 = por %p98, %p99
    %p101 = scmp.ne.s32.totalorder %s90, %s91
    %p102 = scmp.eq.s32.totalorder %s14, 0
    %p103 = por %p101, %p102
    %p104 = scmp.ne.s32.totalorder %s90, %s91
    %p105 = scmp.eq.s32.totalorder %s15, 1
    %p106 = por %p104, %p105
    %p108 = scmp.ne.s32.totalorder %s91, %s107
    %p109 = scmp.eq.s32.totalorder %s15, 0
    %p110 = por %p108, %p109
    %p111 = scmp.le.s32.totalorder 1, %s9
    %p112 = scmp.lt.s32.totalorder %s9, 3
    %p113 = pnand %p111, %p112
    %p114 = pneg %p113
    // Predicated region
    $region9: #{mixed_5a.1} parent=5 // pred_check
      _
    $region10: #{mixed_5a.1} parent=5 // pred_check_branch
      %116 = sbr.rel (%p113) target = $region12
    $region11: #{mixed_5a.1} parent=5 // pred_region
      %s117 = ssub.s32 %s9, 1
      // Predicated region
      $region13: #{mixed_5a.1} parent=11 // pred_check
        %p118 = pneg %p56
      $region14: #{mixed_5a.1} parent=11 // pred_check_branch
        %120 = sbr.rel (%p118) target = $region16
      $region15: #{mixed_5a.1} parent=11 // pred_region
        _
      $region16: #{mixed_5a.1} parent=11 // pred_fallthru
        _
      // Predicated region
      $region17: #{mixed_5a.1} parent=11 // pred_check
        %p121 = pneg %p77
      $region18: #{mixed_5a.1} parent=11 // pred_check_branch
        %123 = sbr.rel (%p121) target = $region20
      $region19: #{mixed_5a.1} parent=11 // pred_region
        _
      $region20: #{mixed_5a.1} parent=11 // pred_fallthru
        _
    $region12: #{mixed_5a.1} parent=5 // pred_fallthru
      _
    %p124 = scmp.lt.s32.totalorder %s9, 2
    // Predicated region
    $region21: #{mixed_5a.1} parent=5 // pred_check
      %p125 = pneg %p124
    $region22: #{mixed_5a.1} parent=5 // pred_check_branch
      %127 = sbr.rel (%p125) target = $region24
    $region23: #{mixed_5a.1} parent=5 // pred_region
      // Predicated region
      $region25: #{mixed_5a.1} parent=23 // pred_check
        %p128 = pneg %p29
      $region26: #{mixed_5a.1} parent=23 // pred_check_branch
        %130 = sbr.rel (%p128) target = $region28
      $region27: #{mixed_5a.1} parent=23 // pred_region
        %p131 = scmp.lt.s32.totalorder %s9, 1
        %s132 = scalar_select %p131, %s9, 1
        %s133 = smul.addr %s132, 28
        %s134 = smul.addr %s133, 8
        %s135 = scalar_lea.vmem %s0, %s134
      $region28: #{mixed_5a.1} parent=23 // pred_fallthru
        _
    $region24: #{mixed_5a.1} parent=5 // pred_fallthru
      _
    %p136 = scmp.le.s32.totalorder 1, %s9
    %p137 = scmp.lt.s32.totalorder %s9, 3
    %p138 = pnand %p136, %p137
    %p139 = pneg %p138
    // Predicated region
    $region29: #{mixed_5a.1} parent=5 // pred_check
      _
    $region30: #{mixed_5a.1} parent=5 // pred_check_branch
      %141 = sbr.rel (%p138) target = $region32
    $region31: #{mixed_5a.1} parent=5 // pred_region
      %s142 = ssub.s32 %s9, 1
      %p143 = scmp.lt.s32.totalorder %s14, 1
      %s144 = scalar_select %p143, %s14, 1
      %s145 = smul.addr %s144, 28
      %s146 = smul.addr %s145, 8
      %s147 = scalar_lea.vmem %s0, %s146
      %p148 = pneg %p35
      %p149 = pneg %p32
      %p150 = pneg %p56
      %p151 = pneg %p53
      %p152 = pneg %p77
      %p153 = pneg %p74
      %p154 = pneg %p103
      %p155 = pneg %p100
      %p156 = scmp.lt.s32.totalorder %s14, 1
      %s157 = scalar_select %p156, %s14, 1
      %s158 = smul.addr %s157, 6
      %s159 = smul.addr %s158, 8
      %s160 = scalar_lea.vmem %s3, %s159
      %p161 = scmp.lt.s32.totalorder %s14, 1
      %s162 = scalar_select %p161, %s14, 1
      %s163 = smul.addr %s162, 28
      %s164 = smul.addr %s163, 8
      %s165 = scalar_lea.vmem %s0, %s164
      %p166 = scmp.lt.s32.totalorder %s14, 1
      %s167 = scalar_select %p166, %s14, 1
      %s168 = smul.addr %s167, 6
      %s169 = smul.addr %s168, 8
      %s170 = scalar_lea.vmem %s3, %s169
      %v171 = vld [vmem:[%s165] sm:$0xff]
      %v172 = vld [vmem:[%s165 + $0x8] sm:$0xff]
      %v173 = vld [vmem:[%s165 + $0x10] sm:$0xff]
      %v174 = vld [vmem:[%s165 + $0x18] sm:$0xff]
      %v175 = vld [vmem:[%s165 + $0x20] sm:$0xff]
      %v176 = vld [vmem:[%s165 + $0x28] sm:$0xff]
      %v177 = vld [vmem:[%s165 + $0x30] sm:$0xff]
      %v178 = vld [vmem:[%s165 + $0x38] sm:$0xff]
      %v179 = vld [vmem:[%s165 + $0x40] sm:$0xff]
      %v180 = vld [vmem:[%s165 + $0x48] sm:$0xff]
      %v181 = vld [vmem:[%s165 + $0x50] sm:$0xff]
      %v182 = vld [vmem:[%s165 + $0x58] sm:$0xff]
      %v183 = vld [vmem:[%s165 + $0x60] sm:$0xff]
      %v184 = vld [vmem:[%s165 + $0x68] sm:$0xff]
      %v185 = vld [vmem:[%s165 + $0x70] sm:$0xff]
      %v186 = vld [vmem:[%s165 + $0x78] sm:$0xff]
      %v187 = vld [vmem:[%s165 + $0x80] sm:$0xff]
      %v188 = vld [vmem:[%s165 + $0x88] sm:$0xff]
      %v189 = vld [vmem:[%s165 + $0x90] sm:$0xff]
      %v190 = vld [vmem:[%s165 + $0x98] sm:$0xff]
      %v191 = vld [vmem:[%s165 + $0xa0] sm:$0xff]
      %v192 = vld [vmem:[%s165 + $0xa8] sm:$0xff]
      %v193 = vld [vmem:[%s165 + $0xb0] sm:$0xff]
      %v194 = vld [vmem:[%s165 + $0xb8] sm:$0xff]
      %v195 = vld [vmem:[%s165 + $0xc0] sm:$0xff]
      %v196 = vld [vmem:[%s165 + $0xc8] sm:$0xff]
      %v197 = vld [vmem:[%s165 + $0xd0] sm:$0xff]
      %v198 = vld [vmem:[%s165 + $0xd8] sm:$0xff]
      %v199 = vld [vmem:[%s1] sm:$0xff]
      %v200 = vld [vmem:[%s1 + $0x8] sm:$0xff]
      %v201 = vld [vmem:[%s1 + $0x10] sm:$0xff]
      %v202 = vld [vmem:[%s1 + $0x18] sm:$0xff]
      %v203 = vld [vmem:[%s1 + $0x20] sm:$0xff]
      %v204 = vld [vmem:[%s1 + $0x28] sm:$0xff]
      %v205 = vld [vmem:[%s1 + $0x30] sm:$0xff]
      %v206 = vld [vmem:[%s1 + $0x38] sm:$0xff]
      %v207 = vld [vmem:[%s1 + $0x40] sm:$0xff]
      %v208 = vld [vmem:[%s1 + $0x48] sm:$0xff]
      %v209 = vld [vmem:[%s1 + $0x50] sm:$0xff]
      %v210 = vld [vmem:[%s1 + $0x58] sm:$0xff]
      %v211 = vld [vmem:[%s1 + $0x60] sm:$0xff]
      %v212 = vld [vmem:[%s1 + $0x68] sm:$0xff]
      %v213 = vld [vmem:[%s1 + $0x70] sm:$0xff]
      %v214 = vld [vmem:[%s1 + $0x78] sm:$0xff]
      %v215 = vld [vmem:[%s1 + $0x80] sm:$0xff]
      %v216 = vld [vmem:[%s1 + $0x88] sm:$0xff]
      %v217 = vld [vmem:[%s1 + $0x90] sm:$0xff]
      %v218 = vld [vmem:[%s1 + $0x98] sm:$0xff]
      %v219 = vld [vmem:[%s1 + $0xa0] sm:$0xff]
      %v220 = vld [vmem:[%s1 + $0xa8] sm:$0xff]
      %v221 = vld [vmem:[%s1 + $0xb0] sm:$0xff]
      %v222 = vld [vmem:[%s1 + $0xb8] sm:$0xff]
      %v223 = vld [vmem:[%s1 + $0xc0] sm:$0xff]
      %v224 = vld [vmem:[%s1 + $0xc8] sm:$0xff]
      %v225 = vld [vmem:[%s1 + $0xd0] sm:$0xff]
      %v226 = vld [vmem:[%s1 + $0xd8] sm:$0xff]
      %v227 = vld [vmem:[%s1 + $0xe0] sm:$0xff]
      %v228 = vld [vmem:[%s1 + $0xe8] sm:$0xff]
      %v229 = vld [vmem:[%s1 + $0xf0] sm:$0xff]
      %v230 = vld [vmem:[%s1 + $0xf8] sm:$0xff]
      %v231 = vld [vmem:[%s1 + $0x100] sm:$0xff]
      %v232 = vld [vmem:[%s1 + $0x108] sm:$0xff]
      %v233 = vld [vmem:[%s1 + $0x110] sm:$0xff]
      %v234 = vld [vmem:[%s1 + $0x118] sm:$0xff]
      %v235 = vld [vmem:[%s1 + $0x120] sm:$0xff]
      %v236 = vld [vmem:[%s1 + $0x128] sm:$0xff]
      %v237 = vld [vmem:[%s1 + $0x130] sm:$0xff]
      %v238 = vld [vmem:[%s1 + $0x138] sm:$0xff]
      %v239 = vld [vmem:[%s1 + $0x140] sm:$0xff]
      %v240 = vld [vmem:[%s1 + $0x148] sm:$0xff]
      %v241 = vld [vmem:[%s1 + $0x150] sm:$0xff]
      %v242 = vld [vmem:[%s1 + $0x158] sm:$0xff]
      %v243 = vld [vmem:[%s1 + $0x160] sm:$0xff]
      %v244 = vld [vmem:[%s1 + $0x168] sm:$0xff]
      %v245 = vld [vmem:[%s1 + $0x170] sm:$0xff]
      %v246 = vld [vmem:[%s1 + $0x178] sm:$0xff]
      %v247 = vld [vmem:[%s1 + $0x180] sm:$0xff]
      %v248 = vld [vmem:[%s1 + $0x188] sm:$0xff]
      %v249 = vld [vmem:[%s1 + $0x190] sm:$0xff]
      %v250 = vld [vmem:[%s1 + $0x198] sm:$0xff]
      %v251 = vld [vmem:[%s1 + $0x1a0] sm:$0xff]
      %v252 = vld [vmem:[%s1 + $0x1a8] sm:$0xff]
      %v253 = vld [vmem:[%s1 + $0x1b0] sm:$0xff]
      %v254 = vld [vmem:[%s1 + $0x1b8] sm:$0xff]
      %v255 = vld [vmem:[%s1 + $0x1c0] sm:$0xff]
      %v256 = vld [vmem:[%s1 + $0x1c8] sm:$0xff]
      %v257 = vld [vmem:[%s1 + $0x1d0] sm:$0xff]
      %v258 = vld [vmem:[%s1 + $0x1d8] sm:$0xff]
      %v259 = vld [vmem:[%s1 + $0x1e0] sm:$0xff]
      %v260 = vld [vmem:[%s1 + $0x1e8] sm:$0xff]
      %v261 = vld [vmem:[%s1 + $0x1f0] sm:$0xff]
      %v262 = vld [vmem:[%s1 + $0x1f8] sm:$0xff]
      %v263 = vld [vmem:[%s1 + $0x200] sm:$0xff]
      %v264 = vld [vmem:[%s1 + $0x208] sm:$0xff]
      %v265 = vld [vmem:[%s1 + $0x210] sm:$0xff]
      %v266 = vld [vmem:[%s1 + $0x218] sm:$0xff]
      %v267 = vld [vmem:[%s1 + $0x220] sm:$0xff]
      %v268 = vld [vmem:[%s1 + $0x228] sm:$0xff]
      %v269 = vld [vmem:[%s1 + $0x230] sm:$0xff]
      %v270 = vld [vmem:[%s1 + $0x238] sm:$0xff]
      %v271 = vld [vmem:[%s1 + $0x240] sm:$0xff]
      %v272 = vld [vmem:[%s1 + $0x248] sm:$0xff]
      %v273 = vld [vmem:[%s1 + $0x250] sm:$0xff]
      %v274 = vld [vmem:[%s1 + $0x258] sm:$0xff]
      %v275 = vld [vmem:[%s1 + $0x260] sm:$0xff]
      %v276 = vld [vmem:[%s1 + $0x268] sm:$0xff]
      %v277 = vld [vmem:[%s1 + $0x270] sm:$0xff]
      %v278 = vld [vmem:[%s1 + $0x278] sm:$0xff]
      %v279 = vld [vmem:[%s1 + $0x280] sm:$0xff]
      %v280 = vld [vmem:[%s1 + $0x288] sm:$0xff]
      %v281 = vld [vmem:[%s1 + $0x290] sm:$0xff]
      %v282 = vld [vmem:[%s1 + $0x298] sm:$0xff]
      %v283 = vld [vmem:[%s1 + $0x2a0] sm:$0xff]
      %v284 = vld [vmem:[%s1 + $0x2a8] sm:$0xff]
      %v285 = vld [vmem:[%s1 + $0x2b0] sm:$0xff]
      %v286 = vld [vmem:[%s1 + $0x2b8] sm:$0xff]
      %v287 = vld [vmem:[%s1 + $0x2c0] sm:$0xff]
      %v288 = vld [vmem:[%s1 + $0x2c8] sm:$0xff]
      %v289 = vld [vmem:[%s1 + $0x2d0] sm:$0xff]
      %v290 = vld [vmem:[%s1 + $0x2d8] sm:$0xff]
      %v291 = vld [vmem:[%s1 + $0x2e0] sm:$0xff]
      %v292 = vld [vmem:[%s1 + $0x2e8] sm:$0xff]
      %v293 = vld [vmem:[%s1 + $0x2f0] sm:$0xff]
      %v294 = vld [vmem:[%s1 + $0x2f8] sm:$0xff]
      %v295 = vld [vmem:[%s1 + $0x300] sm:$0xff]
      %v296 = vld [vmem:[%s1 + $0x308] sm:$0xff]
      %v297 = vld [vmem:[%s1 + $0x310] sm:$0xff]
      %v298 = vld [vmem:[%s1 + $0x318] sm:$0xff]
      %v299 = vld [vmem:[%s1 + $0x320] sm:$0xff]
      %v300 = vld [vmem:[%s1 + $0x328] sm:$0xff]
      %v301 = vld [vmem:[%s1 + $0x330] sm:$0xff]
      %v302 = vld [vmem:[%s1 + $0x338] sm:$0xff]
      %v303 = vld [vmem:[%s1 + $0x340] sm:$0xff]
      %v304 = vld [vmem:[%s1 + $0x348] sm:$0xff]
      %v305 = vld [vmem:[%s1 + $0x350] sm:$0xff]
      %v306 = vld [vmem:[%s1 + $0x358] sm:$0xff]
      %v307 = vld [vmem:[%s1 + $0x360] sm:$0xff]
      %v308 = vld [vmem:[%s1 + $0x368] sm:$0xff]
      %v309 = vld [vmem:[%s1 + $0x370] sm:$0xff]
      %v310 = vld [vmem:[%s1 + $0x378] sm:$0xff]
      %v311 = vld [vmem:[%s1 + $0x380] sm:$0xff]
      %v312 = vld [vmem:[%s1 + $0x388] sm:$0xff]
      %v313 = vld [vmem:[%s1 + $0x390] sm:$0xff]
      %v314 = vld [vmem:[%s1 + $0x398] sm:$0xff]
      %v315 = vld [vmem:[%s1 + $0x3a0] sm:$0xff]
      %v316 = vld [vmem:[%s1 + $0x3a8] sm:$0xff]
      %v317 = vld [vmem:[%s1 + $0x3b0] sm:$0xff]
      %v318 = vld [vmem:[%s1 + $0x3b8] sm:$0xff]
      %v319 = vld [vmem:[%s1 + $0x3c0] sm:$0xff]
      %v320 = vld [vmem:[%s1 + $0x3c8] sm:$0xff]
      %v321 = vld [vmem:[%s1 + $0x3d0] sm:$0xff]
      %v322 = vld [vmem:[%s1 + $0x3d8] sm:$0xff]
      %v323 = vld [vmem:[%s1 + $0x3e0] sm:$0xff]
      %v324 = vld [vmem:[%s1 + $0x3e8] sm:$0xff]
      %v325 = vld [vmem:[%s1 + $0x3f0] sm:$0xff]
      %v326 = vld [vmem:[%s1 + $0x3f8] sm:$0xff]
      %v327 = vld [vmem:[%s1 + $0x400] sm:$0xff]
      %v328 = vld [vmem:[%s1 + $0x408] sm:$0xff]
      %v329 = vld [vmem:[%s1 + $0x410] sm:$0xff]
      %v330 = vld [vmem:[%s1 + $0x418] sm:$0xff]
      %v331 = vld [vmem:[%s1 + $0x420] sm:$0xff]
      %v332 = vld [vmem:[%s1 + $0x428] sm:$0xff]
      %v333 = vld [vmem:[%s1 + $0x430] sm:$0xff]
      %v334 = vld [vmem:[%s1 + $0x438] sm:$0xff]
      %v335 = vld [vmem:[%s1 + $0x440] sm:$0xff]
      %v336 = vld [vmem:[%s1 + $0x448] sm:$0xff]
      %v337 = vld [vmem:[%s1 + $0x450] sm:$0xff]
      %v338 = vld [vmem:[%s1 + $0x458] sm:$0xff]
      %v339 = vld [vmem:[%s1 + $0x460] sm:$0xff]
      %v340 = vld [vmem:[%s1 + $0x468] sm:$0xff]
      %v341 = vld [vmem:[%s1 + $0x470] sm:$0xff]
      %v342 = vld [vmem:[%s1 + $0x478] sm:$0xff]
      %v343 = vld [vmem:[%s1 + $0x480] sm:$0xff]
      %v344 = vld [vmem:[%s1 + $0x488] sm:$0xff]
      %v345 = vld [vmem:[%s1 + $0x490] sm:$0xff]
      %v346 = vld [vmem:[%s1 + $0x498] sm:$0xff]
      %v347 = vld [vmem:[%s1 + $0x4a0] sm:$0xff]
      %v348 = vld [vmem:[%s1 + $0x4a8] sm:$0xff]
      %v349 = vld [vmem:[%s1 + $0x4b0] sm:$0xff]
      %v350 = vld [vmem:[%s1 + $0x4b8] sm:$0xff]
      %v351 = vld [vmem:[%s1 + $0x4c0] sm:$0xff]
      %v352 = vld [vmem:[%s1 + $0x4c8] sm:$0xff]
      %v353 = vld [vmem:[%s1 + $0x4d0] sm:$0xff]
      %v354 = vld [vmem:[%s1 + $0x4d8] sm:$0xff]
      %v355 = vld [vmem:[%s1 + $0x4e0] sm:$0xff]
      %v356 = vld [vmem:[%s1 + $0x4e8] sm:$0xff]
      %v357 = vld [vmem:[%s1 + $0x4f0] sm:$0xff]
      %v358 = vld [vmem:[%s1 + $0x4f8] sm:$0xff]
      %v359 = vld [vmem:[%s1 + $0x500] sm:$0xff]
      %v360 = vld [vmem:[%s1 + $0x508] sm:$0xff]
      %v361 = vld [vmem:[%s1 + $0x510] sm:$0xff]
      %v362 = vld [vmem:[%s1 + $0x518] sm:$0xff]
      %v363 = vld [vmem:[%s1 + $0x520] sm:$0xff]
      %v364 = vld [vmem:[%s1 + $0x528] sm:$0xff]
      %v365 = vld [vmem:[%s1 + $0x530] sm:$0xff]
      %v366 = vld [vmem:[%s1 + $0x538] sm:$0xff]
      %v367 = vld [vmem:[%s1 + $0x540] sm:$0xff]
      %v368 = vld [vmem:[%s1 + $0x548] sm:$0xff]
      %v369 = vld [vmem:[%s1 + $0x550] sm:$0xff]
      %v370 = vld [vmem:[%s1 + $0x558] sm:$0xff]
      %v371 = vld [vmem:[%s1 + $0x560] sm:$0xff]
      %v372 = vld [vmem:[%s1 + $0x568] sm:$0xff]
      %v373 = vld [vmem:[%s1 + $0x570] sm:$0xff]
      %v374 = vld [vmem:[%s1 + $0x578] sm:$0xff]
      %v375 = vld [vmem:[%s1 + $0x580] sm:$0xff]
      %v376 = vld [vmem:[%s1 + $0x588] sm:$0xff]
      %v377 = vld [vmem:[%s1 + $0x590] sm:$0xff]
      %v378 = vld [vmem:[%s1 + $0x598] sm:$0xff]
      %v379 = vld [vmem:[%s1 + $0x5a0] sm:$0xff]
      %v380 = vld [vmem:[%s1 + $0x5a8] sm:$0xff]
      %v381 = vld [vmem:[%s1 + $0x5b0] sm:$0xff]
      %v382 = vld [vmem:[%s1 + $0x5b8] sm:$0xff]
      %v383 = vld [vmem:[%s1 + $0x5c0] sm:$0xff]
      %v384 = vld [vmem:[%s1 + $0x5c8] sm:$0xff]
      %v385 = vld [vmem:[%s1 + $0x5d0] sm:$0xff]
      %v386 = vld [vmem:[%s1 + $0x5d8] sm:$0xff]
      %v387 = vld [vmem:[%s1 + $0x5e0] sm:$0xff]
      %v388 = vld [vmem:[%s1 + $0x5e8] sm:$0xff]
      %v389 = vld [vmem:[%s1 + $0x5f0] sm:$0xff]
      %v390 = vld [vmem:[%s1 + $0x5f8] sm:$0xff]
      %v391 = vld [vmem:[%s1 + $0x600] sm:$0xff]
      %v392 = vld [vmem:[%s1 + $0x608] sm:$0xff]
      %v393 = vld [vmem:[%s1 + $0x610] sm:$0xff]
      %v394 = vld [vmem:[%s1 + $0x618] sm:$0xff]
      %v395 = vld [vmem:[%s1 + $0x620] sm:$0xff]
      %v396 = vld [vmem:[%s1 + $0x628] sm:$0xff]
      %v397 = vld [vmem:[%s1 + $0x630] sm:$0xff]
      %v398 = vld [vmem:[%s1 + $0x638] sm:$0xff]
      %v399 = vld [vmem:[%s1 + $0x640] sm:$0xff]
      %v400 = vld [vmem:[%s1 + $0x648] sm:$0xff]
      %v401 = vld [vmem:[%s1 + $0x650] sm:$0xff]
      %v402 = vld [vmem:[%s1 + $0x658] sm:$0xff]
      %v403 = vld [vmem:[%s1 + $0x660] sm:$0xff]
      %v404 = vld [vmem:[%s1 + $0x668] sm:$0xff]
      %v405 = vld [vmem:[%s1 + $0x670] sm:$0xff]
      %v406 = vld [vmem:[%s1 + $0x678] sm:$0xff]
      %v407 = vld [vmem:[%s1 + $0x680] sm:$0xff]
      %v408 = vld [vmem:[%s1 + $0x688] sm:$0xff]
      %v409 = vld [vmem:[%s1 + $0x690] sm:$0xff]
      %v410 = vld [vmem:[%s1 + $0x698] sm:$0xff]
      %v411 = vld [vmem:[%s1 + $0x6a0] sm:$0xff]
      %v412 = vld [vmem:[%s1 + $0x6a8] sm:$0xff]
      %v413 = vld [vmem:[%s1 + $0x6b0] sm:$0xff]
      %v414 = vld [vmem:[%s1 + $0x6b8] sm:$0xff]
      %v415 = vld [vmem:[%s1 + $0x6c0] sm:$0xff]
      %v416 = vld [vmem:[%s1 + $0x6c8] sm:$0xff]
      %v417 = vld [vmem:[%s1 + $0x6d0] sm:$0xff]
      %v418 = vld [vmem:[%s1 + $0x6d8] sm:$0xff]
      %v419 = vld [vmem:[%s1 + $0x6e0] sm:$0xff]
      %v420 = vld [vmem:[%s1 + $0x6e8] sm:$0xff]
      %v421 = vld [vmem:[%s1 + $0x6f0] sm:$0xff]
      %v422 = vld [vmem:[%s1 + $0x6f8] sm:$0xff]
      %v423 = vld [vmem:[%s1 + $0x700] sm:$0xff]
      %v424 = vld [vmem:[%s1 + $0x708] sm:$0xff]
      %v425 = vld [vmem:[%s1 + $0x710] sm:$0xff]
      %v426 = vld [vmem:[%s1 + $0x718] sm:$0xff]
      %v427 = vld [vmem:[%s1 + $0x720] sm:$0xff]
      %v428 = vld [vmem:[%s1 + $0x728] sm:$0xff]
      %v429 = vld [vmem:[%s1 + $0x730] sm:$0xff]
      %v430 = vld [vmem:[%s1 + $0x738] sm:$0xff]
      %v431 = vld [vmem:[%s1 + $0x740] sm:$0xff]
      %v432 = vld [vmem:[%s1 + $0x748] sm:$0xff]
      %v433 = vld [vmem:[%s1 + $0x750] sm:$0xff]
      %v434 = vld [vmem:[%s1 + $0x758] sm:$0xff]
      %v435 = vld [vmem:[%s1 + $0x760] sm:$0xff]
      %v436 = vld [vmem:[%s1 + $0x768] sm:$0xff]
      %v437 = vld [vmem:[%s1 + $0x770] sm:$0xff]
      %v438 = vld [vmem:[%s1 + $0x778] sm:$0xff]
      %v439 = vld [vmem:[%s1 + $0x780] sm:$0xff]
      %v440 = vld [vmem:[%s1 + $0x788] sm:$0xff]
      %v441 = vld [vmem:[%s1 + $0x790] sm:$0xff]
      %v442 = vld [vmem:[%s1 + $0x798] sm:$0xff]
      %v443 = vld [vmem:[%s1 + $0x7a0] sm:$0xff]
      %v444 = vld [vmem:[%s1 + $0x7a8] sm:$0xff]
      %v445 = vld [vmem:[%s1 + $0x7b0] sm:$0xff]
      %v446 = vld [vmem:[%s1 + $0x7b8] sm:$0xff]
      %v447 = vld [vmem:[%s1 + $0x7c0] sm:$0xff]
      %v448 = vld [vmem:[%s1 + $0x7c8] sm:$0xff]
      %v449 = vld [vmem:[%s1 + $0x7d0] sm:$0xff]
      %v450 = vld [vmem:[%s1 + $0x7d8] sm:$0xff]
      %v451 = vld [vmem:[%s1 + $0x7e0] sm:$0xff]
      %v452 = vld [vmem:[%s1 + $0x7e8] sm:$0xff]
      %v453 = vld [vmem:[%s1 + $0x7f0] sm:$0xff]
      %v454 = vld [vmem:[%s1 + $0x7f8] sm:$0xff]
      %v455 = vld [vmem:[%s1 + $0x800] sm:$0xff]
      %v456 = vld [vmem:[%s1 + $0x808] sm:$0xff]
      %v457 = vld [vmem:[%s1 + $0x810] sm:$0xff]
      %v458 = vld [vmem:[%s1 + $0x818] sm:$0xff]
      %v459 = vld [vmem:[%s1 + $0x820] sm:$0xff]
      %v460 = vld [vmem:[%s1 + $0x828] sm:$0xff]
      %v461 = vld [vmem:[%s1 + $0x830] sm:$0xff]
      %v462 = vld [vmem:[%s1 + $0x838] sm:$0xff]
      %v463 = vld [vmem:[%s1 + $0x840] sm:$0xff]
      %v464 = vld [vmem:[%s1 + $0x848] sm:$0xff]
      %v465 = vld [vmem:[%s1 + $0x850] sm:$0xff]
      %v466 = vld [vmem:[%s1 + $0x858] sm:$0xff]
      %v467 = vld [vmem:[%s1 + $0x860] sm:$0xff]
      %v468 = vld [vmem:[%s1 + $0x868] sm:$0xff]
      %v469 = vld [vmem:[%s1 + $0x870] sm:$0xff]
      %v470 = vld [vmem:[%s1 + $0x878] sm:$0xff]
      %v471 = vld [vmem:[%s1 + $0x880] sm:$0xff]
      %v472 = vld [vmem:[%s1 + $0x888] sm:$0xff]
      %v473 = vld [vmem:[%s1 + $0x890] sm:$0xff]
      %v474 = vld [vmem:[%s1 + $0x898] sm:$0xff]
      %v475 = vld [vmem:[%s1 + $0x8a0] sm:$0xff]
      %v476 = vld [vmem:[%s1 + $0x8a8] sm:$0xff]
      %v477 = vld [vmem:[%s1 + $0x8b0] sm:$0xff]
      %v478 = vld [vmem:[%s1 + $0x8b8] sm:$0xff]
      %v479 = vld [vmem:[%s1 + $0x8c0] sm:$0xff]
      %v480 = vld [vmem:[%s1 + $0x8c8] sm:$0xff]
      %v481 = vld [vmem:[%s1 + $0x8d0] sm:$0xff]
      %v482 = vld [vmem:[%s1 + $0x8d8] sm:$0xff]
      %v483 = vld [vmem:[%s1 + $0x8e0] sm:$0xff]
      %v484 = vld [vmem:[%s1 + $0x8e8] sm:$0xff]
      %v485 = vld [vmem:[%s1 + $0x8f0] sm:$0xff]
      %v486 = vld [vmem:[%s1 + $0x8f8] sm:$0xff]
      %v487 = vld [vmem:[%s1 + $0x900] sm:$0xff]
      %v488 = vld [vmem:[%s1 + $0x908] sm:$0xff]
      %v489 = vld [vmem:[%s1 + $0x910] sm:$0xff]
      %v490 = vld [vmem:[%s1 + $0x918] sm:$0xff]
      %v491 = vld [vmem:[%s1 + $0x920] sm:$0xff]
      %v492 = vld [vmem:[%s1 + $0x928] sm:$0xff]
      %v493 = vld [vmem:[%s1 + $0x930] sm:$0xff]
      %v494 = vld [vmem:[%s1 + $0x938] sm:$0xff]
      %v495 = vld [vmem:[%s1 + $0x940] sm:$0xff]
      %v496 = vld [vmem:[%s1 + $0x948] sm:$0xff]
      %v497 = vld [vmem:[%s1 + $0x950] sm:$0xff]
      %v498 = vld [vmem:[%s1 + $0x958] sm:$0xff]
      %v499 = vld [vmem:[%s1 + $0x960] sm:$0xff]
      %v500 = vld [vmem:[%s1 + $0x968] sm:$0xff]
      %v501 = vld [vmem:[%s1 + $0x970] sm:$0xff]
      %v502 = vld [vmem:[%s1 + $0x978] sm:$0xff]
      %v503 = vld [vmem:[%s1 + $0x980] sm:$0xff]
      %v504 = vld [vmem:[%s1 + $0x988] sm:$0xff]
      %v505 = vld [vmem:[%s1 + $0x990] sm:$0xff]
      %v506 = vld [vmem:[%s1 + $0x998] sm:$0xff]
      %v507 = vld [vmem:[%s1 + $0x9a0] sm:$0xff]
      %v508 = vld [vmem:[%s1 + $0x9a8] sm:$0xff]
      %v509 = vld [vmem:[%s1 + $0x9b0] sm:$0xff]
      %v510 = vld [vmem:[%s1 + $0x9b8] sm:$0xff]
      %v511 = vld [vmem:[%s1 + $0x9c0] sm:$0xff]
      %v512 = vld [vmem:[%s1 + $0x9c8] sm:$0xff]
      %v513 = vld [vmem:[%s1 + $0x9d0] sm:$0xff]
      %v514 = vld [vmem:[%s1 + $0x9d8] sm:$0xff]
      %v515 = vld [vmem:[%s1 + $0x9e0] sm:$0xff]
      %v516 = vld [vmem:[%s1 + $0x9e8] sm:$0xff]
      %v517 = vld [vmem:[%s1 + $0x9f0] sm:$0xff]
      %v518 = vld [vmem:[%s1 + $0x9f8] sm:$0xff]
      %v519 = vld [vmem:[%s1 + $0xa00] sm:$0xff]
      %v520 = vld [vmem:[%s1 + $0xa08] sm:$0xff]
      %v521 = vld [vmem:[%s1 + $0xa10] sm:$0xff]
      %v522 = vld [vmem:[%s1 + $0xa18] sm:$0xff]
      %v523 = vld [vmem:[%s1 + $0xa20] sm:$0xff]
      %v524 = vld [vmem:[%s1 + $0xa28] sm:$0xff]
      %v525 = vld [vmem:[%s1 + $0xa30] sm:$0xff]
      %v526 = vld [vmem:[%s1 + $0xa38] sm:$0xff]
      %v527 = vld [vmem:[%s1 + $0xa40] sm:$0xff]
      %v528 = vld [vmem:[%s1 + $0xa48] sm:$0xff]
      %v529 = vld [vmem:[%s1 + $0xa50] sm:$0xff]
      %v530 = vld [vmem:[%s1 + $0xa58] sm:$0xff]
      %v531 = vld [vmem:[%s1 + $0xa60] sm:$0xff]
      %v532 = vld [vmem:[%s1 + $0xa68] sm:$0xff]
      %v533 = vld [vmem:[%s1 + $0xa70] sm:$0xff]
      %v534 = vld [vmem:[%s1 + $0xa78] sm:$0xff]
      %v535 = vld [vmem:[%s1 + $0xa80] sm:$0xff]
      %v536 = vld [vmem:[%s1 + $0xa88] sm:$0xff]
      %v537 = vld [vmem:[%s1 + $0xa90] sm:$0xff]
      %v538 = vld [vmem:[%s1 + $0xa98] sm:$0xff]
      %v539 = vld [vmem:[%s1 + $0xaa0] sm:$0xff]
      %v540 = vld [vmem:[%s1 + $0xaa8] sm:$0xff]
      %v541 = vld [vmem:[%s1 + $0xab0] sm:$0xff]
      %v542 = vld [vmem:[%s1 + $0xab8] sm:$0xff]
      %v543 = vld [vmem:[%s1 + $0xac0] sm:$0xff]
      %v544 = vld [vmem:[%s1 + $0xac8] sm:$0xff]
      %v545 = vld [vmem:[%s1 + $0xad0] sm:$0xff]
      %v546 = vld [vmem:[%s1 + $0xad8] sm:$0xff]
      %v547 = vld [vmem:[%s1 + $0xae0] sm:$0xff]
      %v548 = vld [vmem:[%s1 + $0xae8] sm:$0xff]
      %v549 = vld [vmem:[%s1 + $0xaf0] sm:$0xff]
      %v550 = vld [vmem:[%s1 + $0xaf8] sm:$0xff]
      %v551 = vld [vmem:[%s1 + $0xb00] sm:$0xff]
      %v552 = vld [vmem:[%s1 + $0xb08] sm:$0xff]
      %v553 = vld [vmem:[%s1 + $0xb10] sm:$0xff]
      %v554 = vld [vmem:[%s1 + $0xb18] sm:$0xff]
      %v555 = vld [vmem:[%s1 + $0xb20] sm:$0xff]
      %v556 = vld [vmem:[%s1 + $0xb28] sm:$0xff]
      %v557 = vld [vmem:[%s1 + $0xb30] sm:$0xff]
      %v558 = vld [vmem:[%s1 + $0xb38] sm:$0xff]
      %v559 = vld [vmem:[%s1 + $0xb40] sm:$0xff]
      %v560 = vld [vmem:[%s1 + $0xb48] sm:$0xff]
      %v561 = vld [vmem:[%s1 + $0xb50] sm:$0xff]
      %v562 = vld [vmem:[%s1 + $0xb58] sm:$0xff]
      %v563 = vld [vmem:[%s1 + $0xb60] sm:$0xff]
      %v564 = vld [vmem:[%s1 + $0xb68] sm:$0xff]
      %v565 = vld [vmem:[%s1 + $0xb70] sm:$0xff]
      %v566 = vld [vmem:[%s1 + $0xb78] sm:$0xff]
      %v567 = vld [vmem:[%s1 + $0xb80] sm:$0xff]
      %v568 = vld [vmem:[%s1 + $0xb88] sm:$0xff]
      %v569 = vld [vmem:[%s1 + $0xb90] sm:$0xff]
      %v570 = vld [vmem:[%s1 + $0xb98] sm:$0xff]
      %v571 = vld [vmem:[%s1 + $0xba0] sm:$0xff]
      %v572 = vld [vmem:[%s1 + $0xba8] sm:$0xff]
      %v573 = vld [vmem:[%s1 + $0xbb0] sm:$0xff]
      %v574 = vld [vmem:[%s1 + $0xbb8] sm:$0xff]
      %v575 = vld [vmem:[%s1 + $0xbc0] sm:$0xff]
      %v576 = vld [vmem:[%s1 + $0xbc8] sm:$0xff]
      %v577 = vld [vmem:[%s1 + $0xbd0] sm:$0xff]
      %v578 = vld [vmem:[%s1 + $0xbd8] sm:$0xff]
      %v579 = vld [vmem:[%s1 + $0xbe0] sm:$0xff]
      %v580 = vld [vmem:[%s1 + $0xbe8] sm:$0xff]
      %v581 = vld [vmem:[%s1 + $0xbf0] sm:$0xff]
      %v582 = vld [vmem:[%s1 + $0xbf8] sm:$0xff]
      %v583 = vld [vmem:[%s1 + $0xc00] sm:$0xff]
      %v584 = vld [vmem:[%s1 + $0xc08] sm:$0xff]
      %v585 = vld [vmem:[%s1 + $0xc10] sm:$0xff]
      %v586 = vld [vmem:[%s1 + $0xc18] sm:$0xff]
      %v587 = vld [vmem:[%s1 + $0xc20] sm:$0xff]
      %v588 = vld [vmem:[%s1 + $0xc28] sm:$0xff]
      %v589 = vld [vmem:[%s1 + $0xc30] sm:$0xff]
      %v590 = vld [vmem:[%s1 + $0xc38] sm:$0xff]
      %v591 = vld [vmem:[%s1 + $0xc40] sm:$0xff]
      %v592 = vld [vmem:[%s1 + $0xc48] sm:$0xff]
      %v593 = vld [vmem:[%s1 + $0xc50] sm:$0xff]
      %v594 = vld [vmem:[%s1 + $0xc58] sm:$0xff]
      %v595 = vld [vmem:[%s1 + $0xc60] sm:$0xff]
      %v596 = vld [vmem:[%s1 + $0xc68] sm:$0xff]
      %v597 = vld [vmem:[%s1 + $0xc70] sm:$0xff]
      %v598 = vld [vmem:[%s1 + $0xc78] sm:$0xff]
      %v599 = vld [vmem:[%s1 + $0xc80] sm:$0xff]
      %v600 = vld [vmem:[%s1 + $0xc88] sm:$0xff]
      %v601 = vld [vmem:[%s1 + $0xc90] sm:$0xff]
      %v602 = vld [vmem:[%s1 + $0xc98] sm:$0xff]
      %v603 = vld [vmem:[%s1 + $0xca0] sm:$0xff]
      %v604 = vld [vmem:[%s1 + $0xca8] sm:$0xff]
      %v605 = vld [vmem:[%s1 + $0xcb0] sm:$0xff]
      %v606 = vld [vmem:[%s1 + $0xcb8] sm:$0xff]
      %v607 = vld [vmem:[%s1 + $0xcc0] sm:$0xff]
      %v608 = vld [vmem:[%s1 + $0xcc8] sm:$0xff]
      %v609 = vld [vmem:[%s1 + $0xcd0] sm:$0xff]
      %v610 = vld [vmem:[%s1 + $0xcd8] sm:$0xff]
      %v611 = vld [vmem:[%s1 + $0xce0] sm:$0xff]
      %v612 = vld [vmem:[%s1 + $0xce8] sm:$0xff]
      %v613 = vld [vmem:[%s1 + $0xcf0] sm:$0xff]
      %v614 = vld [vmem:[%s1 + $0xcf8] sm:$0xff]
      %v615 = vld [vmem:[%s1 + $0xd00] sm:$0xff]
      %v616 = vld [vmem:[%s1 + $0xd08] sm:$0xff]
      %v617 = vld [vmem:[%s1 + $0xd10] sm:$0xff]
      %v618 = vld [vmem:[%s1 + $0xd18] sm:$0xff]
      %v619 = vld [vmem:[%s1 + $0xd20] sm:$0xff]
      %v620 = vld [vmem:[%s1 + $0xd28] sm:$0xff]
      %v621 = vld [vmem:[%s1 + $0xd30] sm:$0xff]
      %v622 = vld [vmem:[%s1 + $0xd38] sm:$0xff]
      %v623 = vld [vmem:[%s1 + $0xd40] sm:$0xff]
      %v624 = vld [vmem:[%s1 + $0xd48] sm:$0xff]
      %v625 = vld [vmem:[%s1 + $0xd50] sm:$0xff]
      %v626 = vld [vmem:[%s1 + $0xd58] sm:$0xff]
      %v627 = vld [vmem:[%s1 + $0xd60] sm:$0xff]
      %v628 = vld [vmem:[%s1 + $0xd68] sm:$0xff]
      %v629 = vld [vmem:[%s1 + $0xd70] sm:$0xff]
      %v630 = vld [vmem:[%s1 + $0xd78] sm:$0xff]
      %v631 = vld [vmem:[%s2] sm:$0x3]
      %v633 = vperm.slane %v631, 0
      %v634 = vperm.slane %v631, 1
      %vm637 = vcmask 523264
      %v639 = vsel %vm637, %v184, 0
      %v642 = vsel %vm637, %v198, 0
      %644 = vmatpush.msra.mxu0 %v229
      %645 = vmatpush.msra.mxu0 %v227
      %646 = vmatpush.msra.mxu0 %v225
      %647 = vmatpush.msra.mxu0 %v223
      %648 = vmatpush.msra.mxu0 %v221
      %649 = vmatpush.msra.mxu0 %v219
      %650 = vmatpush.msra.mxu0 %v217
      %651 = vmatpush.msra.mxu0 %v215
      %652 = vmatpush.msra.mxu0 %v213
      %653 = vmatpush.msra.mxu0 %v211
      %654 = vmatpush.msra.mxu0 %v209
      %655 = vmatpush.msra.mxu0 %v207
      %656 = vmatpush.msra.mxu0 %v205
      %657 = vmatpush.msra.mxu0 %v203
      %658 = vmatpush.msra.mxu0 %v201
      %659 = vmatpush.msra.mxu0 %v199
      %660 = vmatmul.f32.gmra.mxu0 %v171
      %v661 = vpop.f32.mrf.mxu0
      %v662 = vadd.f32 %v633, %v661
      %663 = vmatmul.f32.gmra.mxu0 %v185
      %v664 = vpop.f32.mrf.mxu0
      %v665 = vadd.f32 %v633, %v664
      %666 = vdwg.mxu0
      %667 = vmatpush.msra.mxu0 %v261
      %668 = vmatpush.msra.mxu0 %v259
      %669 = vmatpush.msra.mxu0 %v257
      %670 = vmatpush.msra.mxu0 %v255
      %671 = vmatpush.msra.mxu0 %v253
      %672 = vmatpush.msra.mxu0 %v251
      %673 = vmatpush.msra.mxu0 %v249
      %674 = vmatpush.msra.mxu0 %v247
      %675 = vmatpush.msra.mxu0 %v245
      %676 = vmatpush.msra.mxu0 %v243
      %677 = vmatpush.msra.mxu0 %v241
      %678 = vmatpush.msra.mxu0 %v239
      %679 = vmatpush.msra.mxu0 %v237
      %680 = vmatpush.msra.mxu0 %v235
      %681 = vmatpush.msra.mxu0 %v233
      %682 = vmatpush.msra.mxu0 %v231
      %683 = vmatmul.f32.gmra.mxu0 %v172
      %v684 = vpop.f32.mrf.mxu0
      %v685 = vadd.f32 %v662, %v684
      %686 = vmatmul.f32.gmra.mxu0 %v186
      %v687 = vpop.f32.mrf.mxu0
      %v688 = vadd.f32 %v665, %v687
      %689 = vdwg.mxu0
      %690 = vmatpush.msra.mxu0 %v293
      %691 = vmatpush.msra.mxu0 %v291
      %692 = vmatpush.msra.mxu0 %v289
      %693 = vmatpush.msra.mxu0 %v287
      %694 = vmatpush.msra.mxu0 %v285
      %695 = vmatpush.msra.mxu0 %v283
      %696 = vmatpush.msra.mxu0 %v281
      %697 = vmatpush.msra.mxu0 %v279
      %698 = vmatpush.msra.mxu0 %v277
      %699 = vmatpush.msra.mxu0 %v275
      %700 = vmatpush.msra.mxu0 %v273
      %701 = vmatpush.msra.mxu0 %v271
      %702 = vmatpush.msra.mxu0 %v269
      %703 = vmatpush.msra.mxu0 %v267
      %704 = vmatpush.msra.mxu0 %v265
      %705 = vmatpush.msra.mxu0 %v263
      %706 = vmatmul.f32.gmra.mxu0 %v173
      %v707 = vpop.f32.mrf.mxu0
      %v708 = vadd.f32 %v685, %v707
      %709 = vmatmul.f32.gmra.mxu0 %v187
      %v710 = vpop.f32.mrf.mxu0
      %v711 = vadd.f32 %v688, %v710
      %712 = vdwg.mxu0
      %713 = vmatpush.msra.mxu0 %v325
      %714 = vmatpush.msra.mxu0 %v323
      %715 = vmatpush.msra.mxu0 %v321
      %716 = vmatpush.msra.mxu0 %v319
      %717 = vmatpush.msra.mxu0 %v317
      %718 = vmatpush.msra.mxu0 %v315
      %719 = vmatpush.msra.mxu0 %v313
      %720 = vmatpush.msra.mxu0 %v311
      %721 = vmatpush.msra.mxu0 %v309
      %722 = vmatpush.msra.mxu0 %v307
      %723 = vmatpush.msra.mxu0 %v305
      %724 = vmatpush.msra.mxu0 %v303
      %725 = vmatpush.msra.mxu0 %v301
      %726 = vmatpush.msra.mxu0 %v299
      %727 = vmatpush.msra.mxu0 %v297
      %728 = vmatpush.msra.mxu0 %v295
      %729 = vmatmul.f32.gmra.mxu0 %v174
      %v730 = vpop.f32.mrf.mxu0
      %v731 = vadd.f32 %v708, %v730
      %732 = vmatmul.f32.gmra.mxu0 %v188
      %v733 = vpop.f32.mrf.mxu0
      %v734 = vadd.f32 %v711, %v733
      %735 = vdwg.mxu0
      %736 = vmatpush.msra.mxu0 %v357
      %737 = vmatpush.msra.mxu0 %v355
      %738 = vmatpush.msra.mxu0 %v353
      %739 = vmatpush.msra.mxu0 %v351
      %740 = vmatpush.msra.mxu0 %v349
      %741 = vmatpush.msra.mxu0 %v347
      %742 = vmatpush.msra.mxu0 %v345
      %743 = vmatpush.msra.mxu0 %v343
      %744 = vmatpush.msra.mxu0 %v341
      %745 = vmatpush.msra.mxu0 %v339
      %746 = vmatpush.msra.mxu0 %v337
      %747 = vmatpush.msra.mxu0 %v335
      %748 = vmatpush.msra.mxu0 %v333
      %749 = vmatpush.msra.mxu0 %v331
      %750 = vmatpush.msra.mxu0 %v329
      %751 = vmatpush.msra.mxu0 %v327
      %752 = vmatmul.f32.gmra.mxu0 %v175
      %v753 = vpop.f32.mrf.mxu0
      %v754 = vadd.f32 %v731, %v753
      %755 = vmatmul.f32.gmra.mxu0 %v189
      %v756 = vpop.f32.mrf.mxu0
      %v757 = vadd.f32 %v734, %v756
      %758 = vdwg.mxu0
      %759 = vmatpush.msra.mxu0 %v389
      %760 = vmatpush.msra.mxu0 %v387
      %761 = vmatpush.msra.mxu0 %v385
      %762 = vmatpush.msra.mxu0 %v383
      %763 = vmatpush.msra.mxu0 %v381
      %764 = vmatpush.msra.mxu0 %v379
      %765 = vmatpush.msra.mxu0 %v377
      %766 = vmatpush.msra.mxu0 %v375
      %767 = vmatpush.msra.mxu0 %v373
      %768 = vmatpush.msra.mxu0 %v371
      %769 = vmatpush.msra.mxu0 %v369
      %770 = vmatpush.msra.mxu0 %v367
      %771 = vmatpush.msra.mxu0 %v365
      %772 = vmatpush.msra.mxu0 %v363
      %773 = vmatpush.msra.mxu0 %v361
      %774 = vmatpush.msra.mxu0 %v359
      %775 = vmatmul.f32.gmra.mxu0 %v176
      %v776 = vpop.f32.mrf.mxu0
      %v777 = vadd.f32 %v754, %v776
      %778 = vmatmul.f32.gmra.mxu0 %v190
      %v779 = vpop.f32.mrf.mxu0
      %v780 = vadd.f32 %v757, %v779
      %781 = vdwg.mxu0
      %782 = vmatpush.msra.mxu0 %v421
      %783 = vmatpush.msra.mxu0 %v419
      %784 = vmatpush.msra.mxu0 %v417
      %785 = vmatpush.msra.mxu0 %v415
      %786 = vmatpush.msra.mxu0 %v413
      %787 = vmatpush.msra.mxu0 %v411
      %788 = vmatpush.msra.mxu0 %v409
      %789 = vmatpush.msra.mxu0 %v407
      %790 = vmatpush.msra.mxu0 %v405
      %791 = vmatpush.msra.mxu0 %v403
      %792 = vmatpush.msra.mxu0 %v401
      %793 = vmatpush.msra.mxu0 %v399
      %794 = vmatpush.msra.mxu0 %v397
      %795 = vmatpush.msra.mxu0 %v395
      %796 = vmatpush.msra.mxu0 %v393
      %797 = vmatpush.msra.mxu0 %v391
      %798 = vmatmul.f32.gmra.mxu0 %v177
      %v799 = vpop.f32.mrf.mxu0
      %v800 = vadd.f32 %v777, %v799
      %801 = vmatmul.f32.gmra.mxu0 %v191
      %v802 = vpop.f32.mrf.mxu0
      %v803 = vadd.f32 %v780, %v802
      %804 = vdwg.mxu0
      %805 = vmatpush.msra.mxu0 %v453
      %806 = vmatpush.msra.mxu0 %v451
      %807 = vmatpush.msra.mxu0 %v449
      %808 = vmatpush.msra.mxu0 %v447
      %809 = vmatpush.msra.mxu0 %v445
      %810 = vmatpush.msra.mxu0 %v443
      %811 = vmatpush.msra.mxu0 %v441
      %812 = vmatpush.msra.mxu0 %v439
      %813 = vmatpush.msra.mxu0 %v437
      %814 = vmatpush.msra.mxu0 %v435
      %815 = vmatpush.msra.mxu0 %v433
      %816 = vmatpush.msra.mxu0 %v431
      %817 = vmatpush.msra.mxu0 %v429
      %818 = vmatpush.msra.mxu0 %v427
      %819 = vmatpush.msra.mxu0 %v425
      %820 = vmatpush.msra.mxu0 %v423
      %821 = vmatmul.f32.gmra.mxu0 %v178
      %v822 = vpop.f32.mrf.mxu0
      %v823 = vadd.f32 %v800, %v822
      %824 = vmatmul.f32.gmra.mxu0 %v192
      %v825 = vpop.f32.mrf.mxu0
      %v826 = vadd.f32 %v803, %v825
      %827 = vdwg.mxu0
      %828 = vmatpush.msra.mxu0 %v485
      %829 = vmatpush.msra.mxu0 %v483
      %830 = vmatpush.msra.mxu0 %v481
      %831 = vmatpush.msra.mxu0 %v479
      %832 = vmatpush.msra.mxu0 %v477
      %833 = vmatpush.msra.mxu0 %v475
      %834 = vmatpush.msra.mxu0 %v473
      %835 = vmatpush.msra.mxu0 %v471
      %836 = vmatpush.msra.mxu0 %v469
      %837 = vmatpush.msra.mxu0 %v467
      %838 = vmatpush.msra.mxu0 %v465
      %839 = vmatpush.msra.mxu0 %v463
      %840 = vmatpush.msra.mxu0 %v461
      %841 = vmatpush.msra.mxu0 %v459
      %842 = vmatpush.msra.mxu0 %v457
      %843 = vmatpush.msra.mxu0 %v455
      %844 = vmatmul.f32.gmra.mxu0 %v179
      %v845 = vpop.f32.mrf.mxu0
      %v846 = vadd.f32 %v823, %v845
      %847 = vmatmul.f32.gmra.mxu0 %v193
      %v848 = vpop.f32.mrf.mxu0
      %v849 = vadd.f32 %v826, %v848
      %850 = vdwg.mxu0
      %851 = vmatpush.msra.mxu0 %v517
      %852 = vmatpush.msra.mxu0 %v515
      %853 = vmatpush.msra.mxu0 %v513
      %854 = vmatpush.msra.mxu0 %v511
      %855 = vmatpush.msra.mxu0 %v509
      %856 = vmatpush.msra.mxu0 %v507
      %857 = vmatpush.msra.mxu0 %v505
      %858 = vmatpush.msra.mxu0 %v503
      %859 = vmatpush.msra.mxu0 %v501
      %860 = vmatpush.msra.mxu0 %v499
      %861 = vmatpush.msra.mxu0 %v497
      %862 = vmatpush.msra.mxu0 %v495
      %863 = vmatpush.msra.mxu0 %v493
      %864 = vmatpush.msra.mxu0 %v491
      %865 = vmatpush.msra.mxu0 %v489
      %866 = vmatpush.msra.mxu0 %v487
      %867 = vmatmul.f32.gmra.mxu0 %v180
      %v868 = vpop.f32.mrf.mxu0
      %v869 = vadd.f32 %v846, %v868
      %870 = vmatmul.f32.gmra.mxu0 %v194
      %v871 = vpop.f32.mrf.mxu0
      %v872 = vadd.f32 %v849, %v871
      %873 = vdwg.mxu0
      %874 = vmatpush.msra.mxu0 %v549
      %875 = vmatpush.msra.mxu0 %v547
      %876 = vmatpush.msra.mxu0 %v545
      %877 = vmatpush.msra.mxu0 %v543
      %878 = vmatpush.msra.mxu0 %v541
      %879 = vmatpush.msra.mxu0 %v539
      %880 = vmatpush.msra.mxu0 %v537
      %881 = vmatpush.msra.mxu0 %v535
      %882 = vmatpush.msra.mxu0 %v533
      %883 = vmatpush.msra.mxu0 %v531
      %884 = vmatpush.msra.mxu0 %v529
      %885 = vmatpush.msra.mxu0 %v527
      %886 = vmatpush.msra.mxu0 %v525
      %887 = vmatpush.msra.mxu0 %v523
      %888 = vmatpush.msra.mxu0 %v521
      %889 = vmatpush.msra.mxu0 %v519
      %890 = vmatmul.f32.gmra.mxu0 %v181
      %v891 = vpop.f32.mrf.mxu0
      %v892 = vadd.f32 %v869, %v891
      %893 = vmatmul.f32.gmra.mxu0 %v195
      %v894 = vpop.f32.mrf.mxu0
      %v895 = vadd.f32 %v872, %v894
      %896 = vdwg.mxu0
      %897 = vmatpush.msra.mxu0 %v581
      %898 = vmatpush.msra.mxu0 %v579
      %899 = vmatpush.msra.mxu0 %v577
      %900 = vmatpush.msra.mxu0 %v575
      %901 = vmatpush.msra.mxu0 %v573
      %902 = vmatpush.msra.mxu0 %v571
      %903 = vmatpush.msra.mxu0 %v569
      %904 = vmatpush.msra.mxu0 %v567
      %905 = vmatpush.msra.mxu0 %v565
      %906 = vmatpush.msra.mxu0 %v563
      %907 = vmatpush.msra.mxu0 %v561
      %908 = vmatpush.msra.mxu0 %v559
      %909 = vmatpush.msra.mxu0 %v557
      %910 = vmatpush.msra.mxu0 %v555
      %911 = vmatpush.msra.mxu0 %v553
      %912 = vmatpush.msra.mxu0 %v551
      %913 = vmatmul.f32.gmra.mxu0 %v182
      %v914 = vpop.f32.mrf.mxu0
      %v915 = vadd.f32 %v892, %v914
      %916 = vmatmul.f32.gmra.mxu0 %v196
      %v917 = vpop.f32.mrf.mxu0
      %v918 = vadd.f32 %v895, %v917
      %919 = vdwg.mxu0
      %920 = vmatpush.msra.mxu0 %v613
      %921 = vmatpush.msra.mxu0 %v611
      %922 = vmatpush.msra.mxu0 %v609
      %923 = vmatpush.msra.mxu0 %v607
      %924 = vmatpush.msra.mxu0 %v605
      %925 = vmatpush.msra.mxu0 %v603
      %926 = vmatpush.msra.mxu0 %v601
      %927 = vmatpush.msra.mxu0 %v599
      %928 = vmatpush.msra.mxu0 %v597
      %929 = vmatpush.msra.mxu0 %v595
      %930 = vmatpush.msra.mxu0 %v593
      %931 = vmatpush.msra.mxu0 %v591
      %932 = vmatpush.msra.mxu0 %v589
      %933 = vmatpush.msra.mxu0 %v587
      %934 = vmatpush.msra.mxu0 %v585
      %935 = vmatpush.msra.mxu0 %v583
      %936 = vmatmul.f32.gmra.mxu0 %v183
      %v937 = vpop.f32.mrf.mxu0
      %v938 = vadd.f32 %v915, %v937
      %939 = vmatmul.f32.gmra.mxu0 %v197
      %v940 = vpop.f32.mrf.mxu0
      %v941 = vadd.f32 %v918, %v940
      %942 = vdwg.mxu0
      %943 = vmatpush.msra.mxu0 0.0
      %944 = vmatpush.msra.mxu0 0.0
      %945 = vmatpush.msra.mxu0 0.0
      %946 = vmatpush.msra.mxu0 0.0
      %947 = vmatpush.msra.mxu0 0.0
      %948 = vmatpush.msra.mxu0 0.0
      %949 = vmatpush.msra.mxu0 0.0
      %950 = vmatpush.msra.mxu0 0.0
      %951 = vmatpush.msra.mxu0 %v629
      %952 = vmatpush.msra.mxu0 %v627
      %953 = vmatpush.msra.mxu0 %v625
      %954 = vmatpush.msra.mxu0 %v623
      %955 = vmatpush.msra.mxu0 %v621
      %956 = vmatpush.msra.mxu0 %v619
      %957 = vmatpush.msra.mxu0 %v617
      %958 = vmatpush.msra.mxu0 %v615
      %959 = vmatmul.f32.gmra.mxu0 %v639
      %v960 = vpop.f32.mrf.mxu0
      %v961 = vadd.f32 %v938, %v960
      %962 = vmatmul.f32.gmra.mxu0 %v642
      %v963 = vpop.f32.mrf.mxu0
      %v964 = vadd.f32 %v941, %v963
      %965 = vdwg.mxu0
      %966 = vmatpush.msra.mxu0 %v230
      %967 = vmatpush.msra.mxu0 %v228
      %968 = vmatpush.msra.mxu0 %v226
      %969 = vmatpush.msra.mxu0 %v224
      %970 = vmatpush.msra.mxu0 %v222
      %971 = vmatpush.msra.mxu0 %v220
      %972 = vmatpush.msra.mxu0 %v218
      %973 = vmatpush.msra.mxu0 %v216
      %974 = vmatpush.msra.mxu0 %v214
      %975 = vmatpush.msra.mxu0 %v212
      %976 = vmatpush.msra.mxu0 %v210
      %977 = vmatpush.msra.mxu0 %v208
      %978 = vmatpush.msra.mxu0 %v206
      %979 = vmatpush.msra.mxu0 %v204
      %980 = vmatpush.msra.mxu0 %v202
      %981 = vmatpush.msra.mxu0 %v200
      %982 = vmatmul.f32.gmra.mxu0 %v171
      %v983 = vpop.f32.mrf.mxu0
      %v984 = vadd.f32 %v634, %v983
      %985 = vmatmul.f32.gmra.mxu0 %v185
      %v986 = vpop.f32.mrf.mxu0
      %v987 = vadd.f32 %v634, %v986
      %988 = vdwg.mxu0
      %989 = vmatpush.msra.mxu0 %v262
      %990 = vmatpush.msra.mxu0 %v260
      %991 = vmatpush.msra.mxu0 %v258
      %992 = vmatpush.msra.mxu0 %v256
      %993 = vmatpush.msra.mxu0 %v254
      %994 = vmatpush.msra.mxu0 %v252
      %995 = vmatpush.msra.mxu0 %v250
      %996 = vmatpush.msra.mxu0 %v248
      %997 = vmatpush.msra.mxu0 %v246
      %998 = vmatpush.msra.mxu0 %v244
      %999 = vmatpush.msra.mxu0 %v242
      %1000 = vmatpush.msra.mxu0 %v240
      %1001 = vmatpush.msra.mxu0 %v238
      %1002 = vmatpush.msra.mxu0 %v236
      %1003 = vmatpush.msra.mxu0 %v234
      %1004 = vmatpush.msra.mxu0 %v232
      %1005 = vmatmul.f32.gmra.mxu0 %v172
      %v1006 = vpop.f32.mrf.mxu0
      %v1007 = vadd.f32 %v984, %v1006
      %1008 = vmatmul.f32.gmra.mxu0 %v186
      %v1009 = vpop.f32.mrf.mxu0
      %v1010 = vadd.f32 %v987, %v1009
      %1011 = vdwg.mxu0
      %1012 = vmatpush.msra.mxu0 %v294
      %1013 = vmatpush.msra.mxu0 %v292
      %1014 = vmatpush.msra.mxu0 %v290
      %1015 = vmatpush.msra.mxu0 %v288
      %1016 = vmatpush.msra.mxu0 %v286
      %1017 = vmatpush.msra.mxu0 %v284
      %1018 = vmatpush.msra.mxu0 %v282
      %1019 = vmatpush.msra.mxu0 %v280
      %1020 = vmatpush.msra.mxu0 %v278
      %1021 = vmatpush.msra.mxu0 %v276
      %1022 = vmatpush.msra.mxu0 %v274
      %1023 = vmatpush.msra.mxu0 %v272
      %1024 = vmatpush.msra.mxu0 %v270
      %1025 = vmatpush.msra.mxu0 %v268
      %1026 = vmatpush.msra.mxu0 %v266
      %1027 = vmatpush.msra.mxu0 %v264
      %1028 = vmatmul.f32.gmra.mxu0 %v173
      %v1029 = vpop.f32.mrf.mxu0
      %v1030 = vadd.f32 %v1007, %v1029
      %1031 = vmatmul.f32.gmra.mxu0 %v187
      %v1032 = vpop.f32.mrf.mxu0
      %v1033 = vadd.f32 %v1010, %v1032
      %1034 = vdwg.mxu0
      %1035 = vmatpush.msra.mxu0 %v326
      %1036 = vmatpush.msra.mxu0 %v324
      %1037 = vmatpush.msra.mxu0 %v322
      %1038 = vmatpush.msra.mxu0 %v320
      %1039 = vmatpush.msra.mxu0 %v318
      %1040 = vmatpush.msra.mxu0 %v316
      %1041 = vmatpush.msra.mxu0 %v314
      %1042 = vmatpush.msra.mxu0 %v312
      %1043 = vmatpush.msra.mxu0 %v310
      %1044 = vmatpush.msra.mxu0 %v308
      %1045 = vmatpush.msra.mxu0 %v306
      %1046 = vmatpush.msra.mxu0 %v304
      %1047 = vmatpush.msra.mxu0 %v302
      %1048 = vmatpush.msra.mxu0 %v300
      %1049 = vmatpush.msra.mxu0 %v298
      %1050 = vmatpush.msra.mxu0 %v296
      %1051 = vmatmul.f32.gmra.mxu0 %v174
      %v1052 = vpop.f32.mrf.mxu0
      %v1053 = vadd.f32 %v1030, %v1052
      %1054 = vmatmul.f32.gmra.mxu0 %v188
      %v1055 = vpop.f32.mrf.mxu0
      %v1056 = vadd.f32 %v1033, %v1055
      %1057 = vdwg.mxu0
      %1058 = vmatpush.msra.mxu0 %v358
      %1059 = vmatpush.msra.mxu0 %v356
      %1060 = vmatpush.msra.mxu0 %v354
      %1061 = vmatpush.msra.mxu0 %v352
      %1062 = vmatpush.msra.mxu0 %v350
      %1063 = vmatpush.msra.mxu0 %v348
      %1064 = vmatpush.msra.mxu0 %v346
      %1065 = vmatpush.msra.mxu0 %v344
      %1066 = vmatpush.msra.mxu0 %v342
      %1067 = vmatpush.msra.mxu0 %v340
      %1068 = vmatpush.msra.mxu0 %v338
      %1069 = vmatpush.msra.mxu0 %v336
      %1070 = vmatpush.msra.mxu0 %v334
      %1071 = vmatpush.msra.mxu0 %v332
      %1072 = vmatpush.msra.mxu0 %v330
      %1073 = vmatpush.msra.mxu0 %v328
      %1074 = vmatmul.f32.gmra.mxu0 %v175
      %v1075 = vpop.f32.mrf.mxu0
      %v1076 = vadd.f32 %v1053, %v1075
      %1077 = vmatmul.f32.gmra.mxu0 %v189
      %v1078 = vpop.f32.mrf.mxu0
      %v1079 = vadd.f32 %v1056, %v1078
      %1080 = vdwg.mxu0
      %1081 = vmatpush.msra.mxu0 %v390
      %1082 = vmatpush.msra.mxu0 %v388
      %1083 = vmatpush.msra.mxu0 %v386
      %1084 = vmatpush.msra.mxu0 %v384
      %1085 = vmatpush.msra.mxu0 %v382
      %1086 = vmatpush.msra.mxu0 %v380
      %1087 = vmatpush.msra.mxu0 %v378
      %1088 = vmatpush.msra.mxu0 %v376
      %1089 = vmatpush.msra.mxu0 %v374
      %1090 = vmatpush.msra.mxu0 %v372
      %1091 = vmatpush.msra.mxu0 %v370
      %1092 = vmatpush.msra.mxu0 %v368
      %1093 = vmatpush.msra.mxu0 %v366
      %1094 = vmatpush.msra.mxu0 %v364
      %1095 = vmatpush.msra.mxu0 %v362
      %1096 = vmatpush.msra.mxu0 %v360
      %1097 = vmatmul.f32.gmra.mxu0 %v176
      %v1098 = vpop.f32.mrf.mxu0
      %v1099 = vadd.f32 %v1076, %v1098
      %1100 = vmatmul.f32.gmra.mxu0 %v190
      %v1101 = vpop.f32.mrf.mxu0
      %v1102 = vadd.f32 %v1079, %v1101
      %1103 = vdwg.mxu0
      %1104 = vmatpush.msra.mxu0 %v422
      %1105 = vmatpush.msra.mxu0 %v420
      %1106 = vmatpush.msra.mxu0 %v418
      %1107 = vmatpush.msra.mxu0 %v416
      %1108 = vmatpush.msra.mxu0 %v414
      %1109 = vmatpush.msra.mxu0 %v412
      %1110 = vmatpush.msra.mxu0 %v410
      %1111 = vmatpush.msra.mxu0 %v408
      %1112 = vmatpush.msra.mxu0 %v406
      %1113 = vmatpush.msra.mxu0 %v404
      %1114 = vmatpush.msra.mxu0 %v402
      %1115 = vmatpush.msra.mxu0 %v400
      %1116 = vmatpush.msra.mxu0 %v398
      %1117 = vmatpush.msra.mxu0 %v396
      %1118 = vmatpush.msra.mxu0 %v394
      %1119 = vmatpush.msra.mxu0 %v392
      %1120 = vmatmul.f32.gmra.mxu0 %v177
      %v1121 = vpop.f32.mrf.mxu0
      %v1122 = vadd.f32 %v1099, %v1121
      %1123 = vmatmul.f32.gmra.mxu0 %v191
      %v1124 = vpop.f32.mrf.mxu0
      %v1125 = vadd.f32 %v1102, %v1124
      %1126 = vdwg.mxu0
      %1127 = vmatpush.msra.mxu0 %v454
      %1128 = vmatpush.msra.mxu0 %v452
      %1129 = vmatpush.msra.mxu0 %v450
      %1130 = vmatpush.msra.mxu0 %v448
      %1131 = vmatpush.msra.mxu0 %v446
      %1132 = vmatpush.msra.mxu0 %v444
      %1133 = vmatpush.msra.mxu0 %v442
      %1134 = vmatpush.msra.mxu0 %v440
      %1135 = vmatpush.msra.mxu0 %v438
      %1136 = vmatpush.msra.mxu0 %v436
      %1137 = vmatpush.msra.mxu0 %v434
      %1138 = vmatpush.msra.mxu0 %v432
      %1139 = vmatpush.msra.mxu0 %v430
      %1140 = vmatpush.msra.mxu0 %v428
      %1141 = vmatpush.msra.mxu0 %v426
      %1142 = vmatpush.msra.mxu0 %v424
      %1143 = vmatmul.f32.gmra.mxu0 %v178
      %v1144 = vpop.f32.mrf.mxu0
      %v1145 = vadd.f32 %v1122, %v1144
      %1146 = vmatmul.f32.gmra.mxu0 %v192
      %v1147 = vpop.f32.mrf.mxu0
      %v1148 = vadd.f32 %v1125, %v1147
      %1149 = vdwg.mxu0
      %1150 = vmatpush.msra.mxu0 %v486
      %1151 = vmatpush.msra.mxu0 %v484
      %1152 = vmatpush.msra.mxu0 %v482
      %1153 = vmatpush.msra.mxu0 %v480
      %1154 = vmatpush.msra.mxu0 %v478
      %1155 = vmatpush.msra.mxu0 %v476
      %1156 = vmatpush.msra.mxu0 %v474
      %1157 = vmatpush.msra.mxu0 %v472
      %1158 = vmatpush.msra.mxu0 %v470
      %1159 = vmatpush.msra.mxu0 %v468
      %1160 = vmatpush.msra.mxu0 %v466
      %1161 = vmatpush.msra.mxu0 %v464
      %1162 = vmatpush.msra.mxu0 %v462
      %1163 = vmatpush.msra.mxu0 %v460
      %1164 = vmatpush.msra.mxu0 %v458
      %1165 = vmatpush.msra.mxu0 %v456
      %1166 = vmatmul.f32.gmra.mxu0 %v179
      %v1167 = vpop.f32.mrf.mxu0
      %v1168 = vadd.f32 %v1145, %v1167
      %1169 = vmatmul.f32.gmra.mxu0 %v193
      %v1170 = vpop.f32.mrf.mxu0
      %v1171 = vadd.f32 %v1148, %v1170
      %1172 = vdwg.mxu0
      %1173 = vmatpush.msra.mxu0 %v518
      %1174 = vmatpush.msra.mxu0 %v516
      %1175 = vmatpush.msra.mxu0 %v514
      %1176 = vmatpush.msra.mxu0 %v512
      %1177 = vmatpush.msra.mxu0 %v510
      %1178 = vmatpush.msra.mxu0 %v508
      %1179 = vmatpush.msra.mxu0 %v506
      %1180 = vmatpush.msra.mxu0 %v504
      %1181 = vmatpush.msra.mxu0 %v502
      %1182 = vmatpush.msra.mxu0 %v500
      %1183 = vmatpush.msra.mxu0 %v498
      %1184 = vmatpush.msra.mxu0 %v496
      %1185 = vmatpush.msra.mxu0 %v494
      %1186 = vmatpush.msra.mxu0 %v492
      %1187 = vmatpush.msra.mxu0 %v490
      %1188 = vmatpush.msra.mxu0 %v488
      %1189 = vmatmul.f32.gmra.mxu0 %v180
      %v1190 = vpop.f32.mrf.mxu0
      %v1191 = vadd.f32 %v1168, %v1190
      %1192 = vmatmul.f32.gmra.mxu0 %v194
      %v1193 = vpop.f32.mrf.mxu0
      %v1194 = vadd.f32 %v1171, %v1193
      %1195 = vdwg.mxu0
      %1196 = vmatpush.msra.mxu0 %v550
      %1197 = vmatpush.msra.mxu0 %v548
      %1198 = vmatpush.msra.mxu0 %v546
      %1199 = vmatpush.msra.mxu0 %v544
      %1200 = vmatpush.msra.mxu0 %v542
      %1201 = vmatpush.msra.mxu0 %v540
      %1202 = vmatpush.msra.mxu0 %v538
      %1203 = vmatpush.msra.mxu0 %v536
      %1204 = vmatpush.msra.mxu0 %v534
      %1205 = vmatpush.msra.mxu0 %v532
      %1206 = vmatpush.msra.mxu0 %v530
      %1207 = vmatpush.msra.mxu0 %v528
      %1208 = vmatpush.msra.mxu0 %v526
      %1209 = vmatpush.msra.mxu0 %v524
      %1210 = vmatpush.msra.mxu0 %v522
      %1211 = vmatpush.msra.mxu0 %v520
      %1212 = vmatmul.f32.gmra.mxu0 %v181
      %v1213 = vpop.f32.mrf.mxu0
      %v1214 = vadd.f32 %v1191, %v1213
      %1215 = vmatmul.f32.gmra.mxu0 %v195
      %v1216 = vpop.f32.mrf.mxu0
      %v1217 = vadd.f32 %v1194, %v1216
      %1218 = vdwg.mxu0
      %1219 = vmatpush.msra.mxu0 %v582
      %1220 = vmatpush.msra.mxu0 %v580
      %1221 = vmatpush.msra.mxu0 %v578
      %1222 = vmatpush.msra.mxu0 %v576
      %1223 = vmatpush.msra.mxu0 %v574
      %1224 = vmatpush.msra.mxu0 %v572
      %1225 = vmatpush.msra.mxu0 %v570
      %1226 = vmatpush.msra.mxu0 %v568
      %1227 = vmatpush.msra.mxu0 %v566
      %1228 = vmatpush.msra.mxu0 %v564
      %1229 = vmatpush.msra.mxu0 %v562
      %1230 = vmatpush.msra.mxu0 %v560
      %1231 = vmatpush.msra.mxu0 %v558
      %1232 = vmatpush.msra.mxu0 %v556
      %1233 = vmatpush.msra.mxu0 %v554
      %1234 = vmatpush.msra.mxu0 %v552
      %1235 = vmatmul.f32.gmra.mxu0 %v182
      %v1236 = vpop.f32.mrf.mxu0
      %v1237 = vadd.f32 %v1214, %v1236
      %1238 = vmatmul.f32.gmra.mxu0 %v196
      %v1239 = vpop.f32.mrf.mxu0
      %v1240 = vadd.f32 %v1217, %v1239
      %1241 = vdwg.mxu0
      %1242 = vmatpush.msra.mxu0 %v614
      %1243 = vmatpush.msra.mxu0 %v612
      %1244 = vmatpush.msra.mxu0 %v610
      %1245 = vmatpush.msra.mxu0 %v608
      %1246 = vmatpush.msra.mxu0 %v606
      %1247 = vmatpush.msra.mxu0 %v604
      %1248 = vmatpush.msra.mxu0 %v602
      %1249 = vmatpush.msra.mxu0 %v600
      %1250 = vmatpush.msra.mxu0 %v598
      %1251 = vmatpush.msra.mxu0 %v596
      %1252 = vmatpush.msra.mxu0 %v594
      %1253 = vmatpush.msra.mxu0 %v592
      %1254 = vmatpush.msra.mxu0 %v590
      %1255 = vmatpush.msra.mxu0 %v588
      %1256 = vmatpush.msra.mxu0 %v586
      %1257 = vmatpush.msra.mxu0 %v584
      %1258 = vmatmul.f32.gmra.mxu0 %v183
      %v1259 = vpop.f32.mrf.mxu0
      %v1260 = vadd.f32 %v1237, %v1259
      %1261 = vmatmul.f32.gmra.mxu0 %v197
      %v1262 = vpop.f32.mrf.mxu0
      %v1263 = vadd.f32 %v1240, %v1262
      %1264 = vdwg.mxu0
      %1265 = vmatpush.msra.mxu0 0.0
      %1266 = vmatpush.msra.mxu0 0.0
      %1267 = vmatpush.msra.mxu0 0.0
      %1268 = vmatpush.msra.mxu0 0.0
      %1269 = vmatpush.msra.mxu0 0.0
      %1270 = vmatpush.msra.mxu0 0.0
      %1271 = vmatpush.msra.mxu0 0.0
      %1272 = vmatpush.msra.mxu0 0.0
      %1273 = vmatpush.msra.mxu0 %v630
      %1274 = vmatpush.msra.mxu0 %v628
      %1275 = vmatpush.msra.mxu0 %v626
      %1276 = vmatpush.msra.mxu0 %v624
      %1277 = vmatpush.msra.mxu0 %v622
      %1278 = vmatpush.msra.mxu0 %v620
      %1279 = vmatpush.msra.mxu0 %v618
      %1280 = vmatpush.msra.mxu0 %v616
      %1281 = vmatmul.f32.gmra.mxu0 %v639
      %v1282 = vpop.f32.mrf.mxu0
      %v1283 = vadd.f32 %v1260, %v1282
      %1284 = vmatmul.f32.gmra.mxu0 %v642
      %v1285 = vpop.f32.mrf.mxu0
      %v1286 = vadd.f32 %v1263, %v1285
      %1287 = vdwg.mxu0
      %v1288 = vmax.f32 %v961, 0.0
      %v1289 = vmax.f32 %v1283, 0.0
      %v1290 = vmax.f32 %v964, 0.0
      %v1291 = vmax.f32 %v1286, 0.0
      %1296 = vrot.lane.b32.xlu0 %v172, 64
      %v1297 = vpop.permute.xlu0 %1296
      %1298 = vrot.lane.b32.xlu0 %v173, 64
      %v1299 = vpop.permute.xlu0 %1298
      %1300 = vrot.lane.b32.xlu0 %v186, 64
      %v1301 = vpop.permute.xlu0 %1300
      %1302 = vrot.lane.b32.xlu0 %v187, 64
      %v1303 = vpop.permute.xlu0 %1302
      %v1304 = vsel %vm637, %v1297, %v1299
      %v1305 = vsel %vm637, %v1301, %v1303
      %v1310 = vmax.f32 %v171, %v1304
      %v1311 = vmax.f32 %v172, %v1299
      %v1312 = vmax.f32 %v185, %v1305
      %v1313 = vmax.f32 %v186, %v1303
      %v1314 = vmax.f32 %v1310, %v174
      %v1315 = vmax.f32 %v1311, %v175
      %v1316 = vmax.f32 %v1312, %v188
      %v1317 = vmax.f32 %v1313, %v189
      %1322 = vrot.lane.b32.xlu0 %v175, 64
      %v1323 = vpop.permute.xlu0 %1322
      %1324 = vrot.lane.b32.xlu0 %v176, 64
      %v1325 = vpop.permute.xlu0 %1324
      %1326 = vrot.lane.b32.xlu0 %v189, 64
      %v1327 = vpop.permute.xlu0 %1326
      %1328 = vrot.lane.b32.xlu0 %v190, 64
      %v1329 = vpop.permute.xlu0 %1328
      %v1330 = vsel %vm637, %v1323, %v1325
      %v1331 = vsel %vm637, %v1327, %v1329
      %v1336 = vmax.f32 %v1314, %v1330
      %v1337 = vmax.f32 %v1315, %v1325
      %v1338 = vmax.f32 %v1316, %v1331
      %v1339 = vmax.f32 %v1317, %v1329
      %v1340 = vmax.f32 %v1336, %v177
      %v1341 = vmax.f32 %v1337, %v178
      %v1342 = vmax.f32 %v1338, %v191
      %v1343 = vmax.f32 %v1339, %v192
      %1348 = vrot.lane.b32.xlu0 %v178, 64
      %v1349 = vpop.permute.xlu0 %1348
      %1350 = vrot.lane.b32.xlu0 %v179, 64
      %v1351 = vpop.permute.xlu0 %1350
      %1352 = vrot.lane.b32.xlu0 %v192, 64
      %v1353 = vpop.permute.xlu0 %1352
      %1354 = vrot.lane.b32.xlu0 %v193, 64
      %v1355 = vpop.permute.xlu0 %1354
      %v1356 = vsel %vm637, %v1349, %v1351
      %v1357 = vsel %vm637, %v1353, %v1355
      %v1362 = vmax.f32 %v1340, %v1356
      %v1363 = vmax.f32 %v1341, %v1351
      %v1364 = vmax.f32 %v1342, %v1357
      %v1365 = vmax.f32 %v1343, %v1355
      %v1366 = vmax.f32 %v1362, %v180
      %v1367 = vmax.f32 %v1363, %v181
      %v1368 = vmax.f32 %v1364, %v194
      %v1369 = vmax.f32 %v1365, %v195
      %1374 = vrot.lane.b32.xlu0 %v181, 64
      %v1375 = vpop.permute.xlu0 %1374
      %1376 = vrot.lane.b32.xlu0 %v182, 64
      %v1377 = vpop.permute.xlu0 %1376
      %1378 = vrot.lane.b32.xlu0 %v195, 64
      %v1379 = vpop.permute.xlu0 %1378
      %1380 = vrot.lane.b32.xlu0 %v196, 64
      %v1381 = vpop.permute.xlu0 %1380
      %v1382 = vsel %vm637, %v1375, %v1377
      %v1383 = vsel %vm637, %v1379, %v1381
      %v1388 = vmax.f32 %v1366, %v1382
      %v1389 = vmax.f32 %v1367, %v1377
      %v1390 = vmax.f32 %v1368, %v1383
      %v1391 = vmax.f32 %v1369, %v1381
      %v1392 = vmax.f32 %v1388, %v183
      %v1393 = vmax.f32 %v1389, %v184
      %v1394 = vmax.f32 %v1390, %v197
      %v1395 = vmax.f32 %v1391, %v198
      %1400 = vrot.lane.b32.xlu0 %v1392, 64
      %v1401 = vpop.permute.xlu0 %1400
      %1402 = vrot.lane.b32.xlu0 %v1393, 64
      %v1403 = vpop.permute.xlu0 %1402
      %1404 = vrot.lane.b32.xlu0 %v1394, 64
      %v1405 = vpop.permute.xlu0 %1404
      %1406 = vrot.lane.b32.xlu0 %v1395, 64
      %v1407 = vpop.permute.xlu0 %1406
      %v1408 = vsel %vm637, %v1401, %v1403
      %v1409 = vsel %vm637, %v1405, %v1407
      %v1414 = vsel %vm637, %v1289, %v1401
      %v1415 = vsel %vm637, %v1291, %v1405
      %1416 = vst [vmem:[%s170] sm:$0xff] %v1288
      %1417 = vst [vmem:[%s170 + $0x8] sm:$0xff] %v1414
      %1418 = vst [vmem:[%s170 + $0x10] sm:$0xff] %v1408
      %1419 = vst [vmem:[%s170 + $0x18] sm:$0xff] %v1290
      %1420 = vst [vmem:[%s170 + $0x20] sm:$0xff] %v1415
      %1421 = vst [vmem:[%s170 + $0x28] sm:$0xff] %v1409
      %p1422 = scmp.lt.s32.totalorder %s14, 1
      %s1423 = scalar_select %p1422, %s14, 1
      %s1424 = smul.addr %s1423, 6
      %s1425 = smul.addr %s1424, 8
      %s1426 = scalar_lea.vmem %s3, %s1425
      // Predicated region
      $region33: #{mixed_5a.1} parent=31 // pred_check
        %p1427 = pneg %p100
      $region34: #{mixed_5a.1} parent=31 // pred_check_branch
        %1429 = sbr.rel (%p1427) target = $region36
      $region35: #{mixed_5a.1} parent=31 // pred_region
        _
      $region36: #{mixed_5a.1} parent=31 // pred_fallthru
        _
    $region32: #{mixed_5a.1} parent=5 // pred_fallthru
      _
    %p1430 = scmp.le.s32.totalorder 2, %s9
    // Predicated region
    $region37: #{mixed_5a.1} parent=5 // pred_check
      %p1431 = pneg %p1430
    $region38: #{mixed_5a.1} parent=5 // pred_check_branch
      %1433 = sbr.rel (%p1431) target = $region40
    $region39: #{mixed_5a.1} parent=5 // pred_region
      %s1434 = ssub.s32 %s9, 2
      // Predicated region
      $region41: #{mixed_5a.1} parent=39 // pred_check
        %p1435 = pneg %p106
      $region42: #{mixed_5a.1} parent=39 // pred_check_branch
        %1437 = sbr.rel (%p1435) target = $region44
      $region43: #{mixed_5a.1} parent=39 // pred_region
        %p1438 = scmp.lt.s32.totalorder %s15, 1
        %s1439 = scalar_select %p1438, %s15, 1
        %s1440 = smul.addr %s1439, 6
        %s1441 = smul.addr %s1440, 8
        %s1442 = scalar_lea.vmem %s3, %s1441
      $region44: #{mixed_5a.1} parent=39 // pred_fallthru
        _
    $region40: #{mixed_5a.1} parent=5 // pred_fallthru
      _
  $region6: #{mixed_5a.1} parent=0 // loop_footer
    %s13 = sadd.s32 1, %s9
  $region7: #{mixed_5a.1} parent=0 // loop_footer_branch
    %8 = sbr.rel target = $region3
  $region8: #{mixed_5a.1} parent=0 // loop_exit
    _

</llo_original>
